<compile_context>
chip_gen: v6e
topology: v6e:2x2x1
jax: 0.10.0
libtpu: 0.0.40
codegen_flags: <defaults>
</compile_context>

<pallas_src>
import functools

import jax
import jax.numpy as jnp
from jax.experimental import pallas as pl
from jax.experimental.pallas import tpu as pltpu

LANE = 128
_STREAM_VMEM_BUDGET = 36 * 2**20   # per-layer streaming kernel tile budget
_FUSED_VMEM_BUDGET = 20 * 2**20    # whole-graph-resident fused kernel budget


def _round_up(x, m):
    return ((x + m - 1) // m) * m


def _pad_2d(a, rows, cols):
    out = jnp.zeros((rows, cols), a.dtype)
    return out.at[: a.shape[0], : a.shape[1]].set(a)


def _vmem_limit(estimate_bytes):
    # At least 32 MiB (above all scoped defaults), at most 48 MiB (v7x-safe).
    return int(min(max(32 * 2**20, estimate_bytes + (8 << 20)), 48 * 2**20))


def _layer_vmem_bytes(tm, tk, fp, hp):
    a = 2 * tm * tk                                   # int8 A tile, double-buffered
    h = 2 * tk * fp * 2                               # bf16 h tile, double-buffered
    w = 2 * (fp * hp * 2 + hp * hp * 2 + 2 * hp * 4)  # weights + biases
    out = 2 * tm * hp * 2                             # bf16 output tile
    acc = tm * fp * 4                                 # f32 accumulator scratch
    return a + h + w + out + acc


def _fused_vmem_bytes(np_, p, num_layers):
    del num_layers
    a = 2 * np_ * np_           # resident int8 A (assume double-buffered)
    a_cast = 2 * np_ * np_      # in-kernel bf16 cast of A
    h0 = 2 * np_ * p * 2        # resident bf16 h0
    h_scr = np_ * p * 2         # bf16 ping-pong scratch
    tmps = 3 * np_ * p * 4      # f32 agg / MLP temporaries
    w = 2 * (2 * p * p * 2 + 2 * p * 4)
    out = 2 * np_ * p * 2
    return a + a_cast + h0 + h_scr + tmps + w + out


def _select_tiles(np_, fp, hp):
    """np_ is already a multiple of 128. Keep >=2 row tiles for v7x's 2 TensorCores."""
    tk = next(c for c in (512, 256, 128) if np_ % c == 0)
    tm = 128
    for c in (2048, 1024, 512, 256, 128):
        if np_ % c != 0:
            continue
        if np_ > 128 and np_ // c < 2:
            continue
        if _layer_vmem_bytes(c, tk, fp, hp) > _STREAM_VMEM_BUDGET:
            continue
        tm = c
        break
    return tm, tk


# --------------------------------------------------------------------- kernels


def _gin_layer_kernel(a_ref, h_ref, w1_ref, b1_ref, w2_ref, b2_ref, o_ref, acc_ref):
    """One GIN layer, streaming-K aggregation + epilogue MLP (general path)."""
    k = pl.program_id(1)

    @pl.when(k == 0)
    def _init():
        acc_ref[...] = jnp.zeros_like(acc_ref)

    # Partial neighborhood sum: (A+I)[row blk, k blk] @ h[k blk, :].
    # A streamed as int8, upcast to bf16 in-VMEM (free VPU slack); f32 accumulation.
    a_bf16 = a_ref[...].astype(jnp.bfloat16)
    acc_ref[...] += jnp.dot(a_bf16, h_ref[...], preferred_element_type=jnp.float32)

    @pl.when(k == pl.num_programs(1) - 1)
    def _epilogue():
        # MLP layer 1: Linear + ReLU
        z = acc_ref[...].astype(jnp.bfloat16)
        t = jnp.dot(z, w1_ref[...], preferred_element_type=jnp.float32) + b1_ref[...]
        t = jnp.maximum(t, 0.0).astype(jnp.bfloat16)
        # MLP layer 2: Linear
        u = jnp.dot(t, w2_ref[...], preferred_element_type=jnp.float32) + b2_ref[...]
        # dropout (eval -> identity) then outer ReLU; emit bf16 directly.
        o_ref[...] = jnp.maximum(u, 0.0).astype(o_ref.dtype)


def gin_layer(a_int8, h_bf16, w1, b1, w2, b2):
    """One fused GINConv + MLP + ReLU layer (per-layer streaming path).

    a_int8: [Np, Np] int8 (A + I, dense, padded)
    h_bf16: [Np, FP] bf16
    w1: [FP, HP] bf16, b1: [1, HP] f32, w2: [HP, HP] bf16, b2: [1, HP] f32
    returns [Np, HP] bf16
    """
    np_ = a_int8.shape[0]
    fp = h_bf16.shape[1]
    hp = w2.shape[1]
    tm, tk = _select_tiles(np_, fp, hp)

    flops = 2 * np_ * np_ * fp + 2 * np_ * fp * hp + 2 * np_ * hp * hp
    bytes_accessed = (
        np_ * np_                                  # A (int8)
        + (np_ // tm) * np_ * fp * 2               # h re-streamed per row tile (bf16)
        + fp * hp * 2 + hp * hp * 2 + 2 * hp * 4   # weights + biases
        + np_ * hp * 2                             # output (bf16)
    )

    return pl.pallas_call(
        _gin_layer_kernel,
        out_shape=jax.ShapeDtypeStruct((np_, hp), jnp.bfloat16),
        grid_spec=pltpu.PrefetchScalarGridSpec(
            num_scalar_prefetch=0,
            grid=(np_ // tm, np_ // tk),
            in_specs=[
                pl.BlockSpec((tm, tk), lambda i, k: (i, k)),   # A tile (streamed int8)
                pl.BlockSpec((tk, fp), lambda i, k: (k, 0)),   # h rows of source block
                pl.BlockSpec((fp, hp), lambda i, k: (0, 0)),   # W1 (resident)
                pl.BlockSpec((1, hp), lambda i, k: (0, 0)),    # b1
                pl.BlockSpec((hp, hp), lambda i, k: (0, 0)),   # W2 (resident)
                pl.BlockSpec((1, hp), lambda i, k: (0, 0)),    # b2
            ],
            out_specs=pl.BlockSpec((tm, hp), lambda i, k: (i, 0)),
            scratch_shapes=[pltpu.VMEM((tm, fp), jnp.float32)],
        ),
        compiler_params=pltpu.CompilerParams(
            dimension_semantics=("parallel", "arbitrary"),
            vmem_limit_bytes=_vmem_limit(_layer_vmem_bytes(tm, tk, fp, hp)),
        ),
        cost_estimate=pl.CostEstimate(
            flops=int(flops), transcendentals=0, bytes_accessed=int(bytes_accessed)
        ),
    )(a_int8, h_bf16, w1, b1, w2, b2)


def _gin_fused_kernel(a_ref, h0_ref, w1_ref, b1_ref, w2_ref, b2_ref, o_ref, h_scr):
    """All layers in one call. A and h0 resident; h ping-pongs through VMEM scratch."""
    layer = pl.program_id(0)

    @pl.when(layer == 0)
    def _seed():
        h_scr[...] = h0_ref[...]

    a_bf16 = a_ref[...].astype(jnp.bfloat16)
    agg = jnp.dot(a_bf16, h_scr[...], preferred_element_type=jnp.float32)
    t = jnp.dot(agg.astype(jnp.bfloat16), w1_ref[0],
                preferred_element_type=jnp.float32) + b1_ref[0]
    t = jnp.maximum(t, 0.0).astype(jnp.bfloat16)
    u = jnp.dot(t, w2_ref[0], preferred_element_type=jnp.float32) + b2_ref[0]
    h_new = jnp.maximum(u, 0.0).astype(jnp.bfloat16)
    h_scr[...] = h_new          # input to the next layer
    o_ref[0] = h_new            # per-layer output (bf16, lane-dense)


def gin_fused(a_int8, h0, w1s, b1s, w2s, b2s):
    """Fused multi-layer path (graph resident in VMEM). Shapes:
    a_int8 [Np,Np] int8, h0 [Np,P] bf16, w1s/w2s [L,P,P] bf16, b1s/b2s [L,1,P] f32."""
    num_layers, p, _ = w2s.shape
    np_ = a_int8.shape[0]

    flops = num_layers * (2 * np_ * np_ * p + 4 * np_ * p * p)
    bytes_accessed = (np_ * np_ + np_ * p * 2
                      + num_layers * (2 * p * p * 2 + 2 * p * 4)
                      + num_layers * np_ * p * 2)

    return pl.pallas_call(
        _gin_fused_kernel,
        out_shape=jax.ShapeDtypeStruct((num_layers, np_, p), jnp.bfloat16),
        grid_spec=pltpu.PrefetchScalarGridSpec(
            num_scalar_prefetch=0,
            grid=(num_layers,),
            in_specs=[
                pl.BlockSpec((np_, np_), lambda l: (0, 0)),    # A resident (fetched once)
                pl.BlockSpec((np_, p), lambda l: (0, 0)),      # h0 resident
                pl.BlockSpec((1, p, p), lambda l: (l, 0, 0)),  # W1[l]
                pl.BlockSpec((1, 1, p), lambda l: (l, 0, 0)),  # b1[l]
                pl.BlockSpec((1, p, p), lambda l: (l, 0, 0)),  # W2[l]
                pl.BlockSpec((1, 1, p), lambda l: (l, 0, 0)),  # b2[l]
            ],
            out_specs=pl.BlockSpec((1, np_, p), lambda l: (l, 0, 0)),
            scratch_shapes=[pltpu.VMEM((np_, p), jnp.bfloat16)],
        ),
        compiler_params=pltpu.CompilerParams(
            dimension_semantics=("arbitrary",),
            vmem_limit_bytes=_vmem_limit(_fused_vmem_bytes(np_, p, num_layers)),
        ),
        cost_estimate=pl.CostEstimate(
            flops=int(flops), transcendentals=0, bytes_accessed=int(bytes_accessed)
        ),
    )(a_int8, h0, w1s, b1s, w2s, b2s)


# --------------------------------------------------------------------- model


def _max_edge_multiplicity(edge_index, num_nodes):
    """Max multiplicity of any (dst, src) pair (exact-in-int8 check), O(E)."""
    if num_nodes > 65535:                      # flat key would overflow uint32
        return None
    src = edge_index[0].astype(jnp.uint32)
    dst = edge_index[1].astype(jnp.uint32)
    if src.size == 0:
        return 0
    flat = dst * jnp.uint32(num_nodes) + src
    _, counts = jnp.unique(flat, return_counts=True)
    return int(counts.max())


def build_adjacency_plus_identity_int8(edge_index, num_nodes):
    """Dense (A + I) in int8. A[dst, src] counts edges src -> dst (GIN sum aggregation;
    eps=0 so the self term is exactly +1 on the diagonal). int8 counts exact to 127."""
    mult = _max_edge_multiplicity(edge_index, num_nodes)
    if mult is not None and mult > 126:
        raise ValueError(f"edge multiplicity {mult} exceeds the int8-exact range")
    src, dst = edge_index[0], edge_index[1]
    try:
        a = jnp.zeros((num_nodes, num_nodes), jnp.int8)
        a = a.at[dst, src].add(jnp.ones(src.shape, jnp.int8))
        a = a + jnp.eye(num_nodes, dtype=jnp.int8)
        return jax.block_until_ready(a)
    except Exception:
        # Fallback if the backend rejects s8 scatter-add: build wider once, narrow.
        a = jnp.zeros((num_nodes, num_nodes), jnp.int32)
        a = a.at[dst, src].add(1)
        a = a + jnp.eye(num_nodes, dtype=jnp.int32)
        return a.astype(jnp.int8)


def init_gin_params(key, num_features, hidden_units, num_layers):
    """Deterministic params. Linear weights stored as [in, out]."""
    params = []
    for i in range(num_layers):
        in_dim = num_features if i == 0 else hidden_units
        k1, k2, k3, k4, key = jax.random.split(key, 5)
        s1 = 1.0 / jnp.sqrt(in_dim)
        s2 = 1.0 / jnp.sqrt(hidden_units)
        w1 = jax.random.uniform(k1, (in_dim, hidden_units), jnp.float32, -s1, s1)
        b1 = jax.random.uniform(k2, (hidden_units,), jnp.float32, -s1, s1)
        w2 = jax.random.uniform(k3, (hidden_units, hidden_units), jnp.float32, -s2, s2)
        b2 = jax.random.uniform(k4, (hidden_units,), jnp.float32, -s2, s2)
        params.append((w1, b1, w2, b2))
    return params


@functools.partial(jax.jit, static_argnames=("hidden_units", "use_fused"))
def gin_encoder_forward(x, a_int8, params, hidden_units, use_fused=True):
    n, f = x.shape
    num_layers = len(params)
    np_ = max(_round_up(n, LANE), LANE)            # row padding (tile-friendly)
    fp = max(_round_up(f, LANE), LANE)             # lane-padded input feature width
    hp = max(_round_up(hidden_units, LANE), LANE)  # lane-padded hidden width

    a_pad = _pad_2d(a_int8, np_, np_)                      # zero rows/cols for padding
    h = _pad_2d(x, np_, fp).astype(jnp.bfloat16)

    w1s, b1s, w2s, b2s = [], [], [], []
    for li, (w1, b1, w2, b2) in enumerate(params):
        in_pad = fp if li == 0 else hp
        w1s.append(_pad_2d(w1, in_pad, hp).astype(jnp.bfloat16))
        b1s.append(_pad_2d(b1[None, :], 1, hp))            # f32
        w2s.append(_pad_2d(w2, hp, hp).astype(jnp.bfloat16))
        b2s.append(_pad_2d(b2[None, :], 1, hp))            # f32

    fused_ok = (use_fused and fp == hp
                and _fused_vmem_bytes(np_, hp, num_layers) <= _FUSED_VMEM_BUDGET)

    if fused_ok:
        outs = gin_fused(a_pad, h, jnp.stack(w1s), jnp.stack(b1s),
                         jnp.stack(w2s), jnp.stack(b2s))   # [L, Np, HP] bf16
        sliced = outs[:, :n, :hidden_units]                # [L, N, hid]
        out = jnp.transpose(sliced, (1, 0, 2)).reshape(n, num_layers * hidden_units)
    else:
        h_list = []
        for li in range(num_layers):
            h = gin_layer(a_pad, h, w1s[li], b1s[li], w2s[li], b2s[li])  # [Np, HP] bf16
            h_list.append(h[:n, :hidden_units])
        out = jnp.concatenate(h_list, axis=1)
    # torch.cat(h_list[1:], 1); final output in f32 (activations kept in bf16 in-kernel).
    return out.astype(jnp.float32)


def gin_encoder_reference(x, a_int8, params):
    """Pure-JAX reference using the same bf16-operand / f32-accumulate math."""
    a = a_int8.astype(jnp.bfloat16)
    h = x.astype(jnp.bfloat16)
    outs = []
    for (w1, b1, w2, b2) in params:
        z = jnp.dot(a, h, preferred_element_type=jnp.float32)
        t = jnp.dot(z.astype(jnp.bfloat16), w1.astype(jnp.bfloat16),
                    preferred_element_type=jnp.float32) + b1
        t = jnp.maximum(t, 0.0)
        u = jnp.dot(t.astype(jnp.bfloat16), w2.astype(jnp.bfloat16),
                    preferred_element_type=jnp.float32) + b2
        h = jnp.maximum(u, 0.0).astype(jnp.bfloat16)
        outs.append(h)
    return jnp.concatenate(outs, axis=1).astype(jnp.float32)


if __name__ == "__main__":
    key = jax.random.PRNGKey(0)
    num_nodes = 512
    num_features = 16
    hidden_units = 32
    num_layers = 3
    num_edges = 2048

    kx, ke_src, ke_dst, kp = jax.random.split(key, 4)
    x = jax.random.normal(kx, (num_nodes, num_features), jnp.float32)
    src = jax.random.randint(ke_src, (num_edges,), 0, num_nodes)
    dst = jax.random.randint(ke_dst, (num_edges,), 0, num_nodes)
    edge_index = jnp.stack([src, dst], axis=0)  # [2, E]

    params = init_gin_params(kp, num_features, hidden_units, num_layers)
    a_int8 = build_adjacency_plus_identity_int8(edge_index, num_nodes)

    ref = gin_encoder_reference(x, a_int8, params)

    # Fused path (A resident in VMEM, one pallas_call for all layers) — demo default.
    out_fused = jax.block_until_ready(
        gin_encoder_forward(x, a_int8, params, hidden_units=hidden_units, use_fused=True))
    assert out_fused.shape == (num_nodes, num_layers * hidden_units), out_fused.shape
    err_f = float(jnp.max(jnp.abs(out_fused - ref)))
    assert jnp.allclose(out_fused, ref, atol=2e-2, rtol=1e-2), f"fused max err {err_f}"

    # Streaming per-layer path (general / large-graph fallback) exercised as well.
    out_stream = jax.block_until_ready(
        gin_encoder_forward(x, a_int8, params, hidden_units=hidden_units, use_fused=False))
    assert out_stream.shape == (num_nodes, num_layers * hidden_units), out_stream.shape
    err_s = float(jnp.max(jnp.abs(out_stream - ref)))
    assert jnp.allclose(out_stream, ref, atol=2e-2, rtol=1e-2), f"stream max err {err_s}"

    print("KERNEL_OK")
</pallas_src>

<mosaic_0001>
module attributes {stable_mosaic.version = 11 : i64} {
  func.func @_gin_fused_kernel(%arg0: i32, %arg1: memref<512x512xi8, #tpu.memory_space<vmem>>, %arg2: memref<512x128xbf16, #tpu.memory_space<vmem>>, %arg3: memref<1x128x128xbf16, #tpu.memory_space<vmem>>, %arg4: memref<1x1x128xf32, #tpu.memory_space<vmem>>, %arg5: memref<1x128x128xbf16, #tpu.memory_space<vmem>>, %arg6: memref<1x1x128xf32, #tpu.memory_space<vmem>>, %arg7: memref<1x512x128xbf16, #tpu.memory_space<vmem>>, %arg8: memref<512x128xbf16, #tpu.memory_space<vmem>>) attributes {dimension_semantics = [#tpu.dimension_semantics<arbitrary>], iteration_bounds = array<i64: 3>, scalar_prefetch = 0 : i64, scratch_operands = 1 : i64, tpu.core_type = #tpu.core_type<tc>, window_params = [{pipeline_mode = #tpu.pipeline_mode<synchronous>, transform_indices = @transform_0, window_bounds = array<i64: 512, 512>}, {pipeline_mode = #tpu.pipeline_mode<synchronous>, transform_indices = @transform_1, window_bounds = array<i64: 512, 128>}, {transform_indices = @transform_2, window_bounds = array<i64: 1, 128, 128>}, {transform_indices = @transform_3, window_bounds = array<i64: 1, 1, 128>}, {transform_indices = @transform_4, window_bounds = array<i64: 1, 128, 128>}, {transform_indices = @transform_5, window_bounds = array<i64: 1, 1, 128>}, {transform_indices = @transform_6, window_bounds = array<i64: 1, 512, 128>}]} {
    %c0_i32 = arith.constant 0 : i32
    %0 = arith.cmpi eq, %arg0, %c0_i32 : i32
    %1 = arith.extui %0 : i1 to i32
    %c0_i32_0 = arith.constant 0 : i32
    %2 = arith.cmpi ne, %1, %c0_i32_0 : i32
    scf.if %2 {
      %c0_25 = arith.constant 0 : index
      %c0_26 = arith.constant 0 : index
      %32 = vector.load %arg2[%c0_25, %c0_26] : memref<512x128xbf16, #tpu.memory_space<vmem>>, vector<512x128xbf16>
      %c0_27 = arith.constant 0 : index
      %c0_28 = arith.constant 0 : index
      %33 = vector.load %arg8[%c0_27, %c0_28] : memref<512x128xbf16, #tpu.memory_space<vmem>>, vector<512x128xbf16>
      tpu.vector_store %arg8[%c0_27, %c0_28], %32 {strides = array<i32>} : memref<512x128xbf16, #tpu.memory_space<vmem>>, vector<512x128xbf16>,
    } else {
    }
    %c0 = arith.constant 0 : index
    %c0_1 = arith.constant 0 : index
    %3 = vector.load %arg1[%c0, %c0_1] : memref<512x512xi8, #tpu.memory_space<vmem>>, vector<512x512xi8>
    %4 = arith.sitofp %3 : vector<512x512xi8> to vector<512x512xbf16>
    %c0_2 = arith.constant 0 : index
    %c0_3 = arith.constant 0 : index
    %5 = vector.load %arg8[%c0_2, %c0_3] : memref<512x128xbf16, #tpu.memory_space<vmem>>, vector<512x128xbf16>
    %cst = arith.constant dense<0.000000e+00> : vector<512x128xf32>
    %6 = tpu.matmul %4, %5, %cst {dimension_numbers = #tpu.dot_dimension_numbers<[1], [0], [0], [1], [0, 0, 1, 1], [], []>} : vector<512x512xbf16>, vector<512x128xbf16>, vector<512x128xf32> -> vector<512x128xf32>
    %7 = arith.truncf %6 : vector<512x128xf32> to vector<512x128xbf16>
    %c0_4 = arith.constant 0 : index
    %c0_5 = arith.constant 0 : index
    %c0_6 = arith.constant 0 : index
    %8 = vector.load %arg3[%c0_4, %c0_5, %c0_6] : memref<1x128x128xbf16, #tpu.memory_space<vmem>>, vector<1x128x128xbf16>
    %9 = vector.shape_cast %8 : vector<1x128x128xbf16> to vector<128x128xbf16>
    %cst_7 = arith.constant dense<0.000000e+00> : vector<512x128xf32>
    %10 = tpu.matmul %7, %9, %cst_7 {dimension_numbers = #tpu.dot_dimension_numbers<[1], [0], [0], [1], [0, 0, 1, 1], [], []>} : vector<512x128xbf16>, vector<128x128xbf16>, vector<512x128xf32> -> vector<512x128xf32>
    %c0_8 = arith.constant 0 : index
    %c0_9 = arith.constant 0 : index
    %c0_10 = arith.constant 0 : index
    %11 = vector.load %arg4[%c0_8, %c0_9, %c0_10] : memref<1x1x128xf32, #tpu.memory_space<vmem>>, vector<1x1x128xf32>
    %12 = vector.shape_cast %11 : vector<1x1x128xf32> to vector<1x128xf32>
    %13 = vector.broadcast %12 : vector<1x128xf32> to vector<512x128xf32>
    %14 = arith.addf %10, %13 : vector<512x128xf32>
    %cst_11 = arith.constant 0.000000e+00 : f32
    %15 = vector.broadcast %cst_11 : f32 to vector<512x128xf32>
    %16 = arith.maximumf %14, %15 : vector<512x128xf32>
    %17 = arith.truncf %16 : vector<512x128xf32> to vector<512x128xbf16>
    %c0_12 = arith.constant 0 : index
    %c0_13 = arith.constant 0 : index
    %c0_14 = arith.constant 0 : index
    %18 = vector.load %arg5[%c0_12, %c0_13, %c0_14] : memref<1x128x128xbf16, #tpu.memory_space<vmem>>, vector<1x128x128xbf16>
    %19 = vector.shape_cast %18 : vector<1x128x128xbf16> to vector<128x128xbf16>
    %cst_15 = arith.constant dense<0.000000e+00> : vector<512x128xf32>
    %20 = tpu.matmul %17, %19, %cst_15 {dimension_numbers = #tpu.dot_dimension_numbers<[1], [0], [0], [1], [0, 0, 1, 1], [], []>} : vector<512x128xbf16>, vector<128x128xbf16>, vector<512x128xf32> -> vector<512x128xf32>
    %c0_16 = arith.constant 0 : index
    %c0_17 = arith.constant 0 : index
    %c0_18 = arith.constant 0 : index
    %21 = vector.load %arg6[%c0_16, %c0_17, %c0_18] : memref<1x1x128xf32, #tpu.memory_space<vmem>>, vector<1x1x128xf32>
    %22 = vector.shape_cast %21 : vector<1x1x128xf32> to vector<1x128xf32>
    %23 = vector.broadcast %22 : vector<1x128xf32> to vector<512x128xf32>
    %24 = arith.addf %20, %23 : vector<512x128xf32>
    %cst_19 = arith.constant 0.000000e+00 : f32
    %25 = vector.broadcast %cst_19 : f32 to vector<512x128xf32>
    %26 = arith.maximumf %24, %25 : vector<512x128xf32>
    %27 = arith.truncf %26 : vector<512x128xf32> to vector<512x128xbf16>
    %c0_20 = arith.constant 0 : index
    %c0_21 = arith.constant 0 : index
    %28 = vector.load %arg8[%c0_20, %c0_21] : memref<512x128xbf16, #tpu.memory_space<vmem>>, vector<512x128xbf16>
    tpu.vector_store %arg8[%c0_20, %c0_21], %27 {strides = array<i32>} : memref<512x128xbf16, #tpu.memory_space<vmem>>, vector<512x128xbf16>,
    %c0_22 = arith.constant 0 : index
    %c0_23 = arith.constant 0 : index
    %c0_24 = arith.constant 0 : index
    %29 = vector.load %arg7[%c0_22, %c0_23, %c0_24] : memref<1x512x128xbf16, #tpu.memory_space<vmem>>, vector<1x512x128xbf16>
    %30 = vector.shape_cast %29 : vector<1x512x128xbf16> to vector<512x128xbf16>
    %31 = vector.shape_cast %27 : vector<512x128xbf16> to vector<1x512x128xbf16>
    tpu.vector_store %arg7[%c0_22, %c0_23, %c0_24], %31 {strides = array<i32>} : memref<1x512x128xbf16, #tpu.memory_space<vmem>>, vector<1x512x128xbf16>,
    return
  }
  func.func @transform_0(%arg0: i32) -> (i32, i32) {
    %c0_i32 = arith.constant 0 : i32
    %c0_i32_0 = arith.constant 0 : i32
    %c0_i32_1 = arith.constant 0 : i32
    return %c0_i32, %c0_i32_0 : i32, i32
  }
  func.func @transform_1(%arg0: i32) -> (i32, i32) {
    %c0_i32 = arith.constant 0 : i32
    %c0_i32_0 = arith.constant 0 : i32
    %c0_i32_1 = arith.constant 0 : i32
    return %c0_i32, %c0_i32_0 : i32, i32
  }
  func.func @transform_2(%arg0: i32) -> (i32, i32, i32) {
    %c0_i32 = arith.constant 0 : i32
    %c0_i32_0 = arith.constant 0 : i32
    %c0_i32_1 = arith.constant 0 : i32
    return %arg0, %c0_i32, %c0_i32_0 : i32, i32, i32
  }
  func.func @transform_3(%arg0: i32) -> (i32, i32, i32) {
    %c0_i32 = arith.constant 0 : i32
    %c0_i32_0 = arith.constant 0 : i32
    %c0_i32_1 = arith.constant 0 : i32
    return %arg0, %c0_i32, %c0_i32_0 : i32, i32, i32
  }
  func.func @transform_4(%arg0: i32) -> (i32, i32, i32) {
    %c0_i32 = arith.constant 0 : i32
    %c0_i32_0 = arith.constant 0 : i32
    %c0_i32_1 = arith.constant 0 : i32
    return %arg0, %c0_i32, %c0_i32_0 : i32, i32, i32
  }
  func.func @transform_5(%arg0: i32) -> (i32, i32, i32) {
    %c0_i32 = arith.constant 0 : i32
    %c0_i32_0 = arith.constant 0 : i32
    %c0_i32_1 = arith.constant 0 : i32
    return %arg0, %c0_i32, %c0_i32_0 : i32, i32, i32
  }
  func.func @transform_6(%arg0: i32) -> (i32, i32, i32) {
    %c0_i32 = arith.constant 0 : i32
    %c0_i32_0 = arith.constant 0 : i32
    %c0_i32_1 = arith.constant 0 : i32
    return %arg0, %c0_i32, %c0_i32_0 : i32, i32, i32
  }
}

</mosaic_0001>

<llo_original>
// kernel: gin_encoder_forward.1
$region0: #{gin_encoder_forward.1}
  #allocation0 [shape = 'u32[]', space=smem, size = 0x4, offset = 0x4, fixed_abs, tag = 'smem constant byte address 0x4 - core index']
  #allocation1 [shape = 'u32[144,128]{1,0:T(1,128)}', space=vmem, size = 0x12000, scoped, tag = 'internal scratch']
  #allocation2 [shape = 'bf16[512,128]{1,0:T(8,128)(2,1)}', space=vmem, size = 0x20000, scoped, tag = 'scratch operand']
  %s0 = inlined_call_operand.vmem [shape: s8[512,512], index: 0, kind: input, shape index: {}]
  %s1 = inlined_call_operand.vmem [shape: bf16[512,128], index: 1, kind: input, shape index: {}]
  %s2 = inlined_call_operand.vmem [shape: bf16[3,128,128], index: 2, kind: input, shape index: {}]
  %s3 = inlined_call_operand.vmem [shape: f32[3,1,128], index: 3, kind: input, shape index: {}]
  %s4 = inlined_call_operand.vmem [shape: bf16[3,128,128], index: 4, kind: input, shape index: {}]
  %s5 = inlined_call_operand.vmem [shape: f32[3,1,128], index: 5, kind: input, shape index: {}]
  %s6 = inlined_call_operand.vmem [shape: bf16[3,512,128], index: 6, kind: output, shape index: {}]
  %s7 = sld [smem:[#allocation0]]
  $region61: #{gin_encoder_forward.1} parent=0
    _
  %s9 = ssub.s32 1, %s7
  %s10 = scalar_select 0, %s9, %s7
  loop: start=0, step=1, limit=5
  $region2: #{gin_encoder_forward.1} parent=0 // loop_pre_header
    _
  $region3: #{gin_encoder_forward.1} parent=0 // loop_header
    %s12 = sphi 0, %s16
    %p13 = scmp.ge.s32.totalorder %s12, 5
    %s20 = sphi 0, %s20
    %s22 = sphi 0, %s20
    %s23 = sphi 0, %s22
    %s37 = sphi 0, %s23
    %s41 = sphi 0, %s41
    %s43 = sphi 0, %s41
    %s44 = sphi 0, %s43
    %s58 = sphi 0, %s44
    %s64 = sphi 0, %s66
    %s67 = sphi 0, %s64
    %s68 = sphi 0, %s67
    %s84 = sphi 0, %s68
    %s90 = sphi 0, %s92
    %s93 = sphi 0, %s90
    %s94 = sphi 0, %s93
    %s110 = sphi 0, %s94
    %s116 = sphi 0, %s118
    %s119 = sphi 0, %s116
    %s120 = sphi 0, %s119
    %s136 = sphi 0, %s120
    %s142 = sphi 0, %s144
    %s145 = sphi 0, %s142
    %s146 = sphi 0, %s145
    %s162 = sphi 0, %s146
    %s168 = sphi 0, %s170
    %s171 = sphi 0, %s168
    %s172 = sphi 0, %s171
    %s188 = sphi 0, %s172
  $region4: #{gin_encoder_forward.1} parent=0 // loop_header_branch
    %15 = sbr.rel (%p13) target = $region8
  $region5: #{gin_encoder_forward.1} parent=0 // loop_body
    %s17 = ssub.s32 %s12, 1
    %s18 = ssub.s32 %s12, 2
    %s19 = sadd.s32 %s12, 1
    %s21 = sadd.s32 %s20, 1
    %p24 = scmp.eq.s32.totalorder %s12, 2
    %p25 = scmp.ne.s32.totalorder %s20, %s22
    %p26 = scmp.eq.s32.totalorder %s12, 0
    %p27 = por %p25, %p26
    %p28 = scmp.ne.s32.totalorder %s20, %s22
    %p29 = scmp.eq.s32.totalorder %s17, 2
    %p30 = por %p28, %p29
    %p31 = scmp.ne.s32.totalorder %s22, %s23
    %p32 = scmp.eq.s32.totalorder %s17, 0
    %p33 = por %p31, %p32
    %p34 = scmp.ne.s32.totalorder %s22, %s23
    %p35 = scmp.eq.s32.totalorder %s18, 2
    %p36 = por %p34, %p35
    %p38 = scmp.ne.s32.totalorder %s23, %s37
    %p39 = scmp.eq.s32.totalorder %s18, 0
    %p40 = por %p38, %p39
    %s42 = sadd.s32 %s41, 1
    %p45 = scmp.eq.s32.totalorder %s12, 2
    %p46 = scmp.ne.s32.totalorder %s41, %s43
    %p47 = scmp.eq.s32.totalorder %s12, 0
    %p48 = por %p46, %p47
    %p49 = scmp.ne.s32.totalorder %s41, %s43
    %p50 = scmp.eq.s32.totalorder %s17, 2
    %p51 = por %p49, %p50
    %p52 = scmp.ne.s32.totalorder %s43, %s44
    %p53 = scmp.eq.s32.totalorder %s17, 0
    %p54 = por %p52, %p53
    %p55 = scmp.ne.s32.totalorder %s43, %s44
    %p56 = scmp.eq.s32.totalorder %s18, 2
    %p57 = por %p55, %p56
    %p59 = scmp.ne.s32.totalorder %s44, %s58
    %p60 = scmp.eq.s32.totalorder %s18, 0
    %p61 = por %p59, %p60
    %s62 = ssub.s32 %s12, %s19
    %p63 = scmp.eq.s32.totalorder %s62, 0
    %s65 = sadd.s32 %s64, 1
    %s66 = scalar_select %p63, %s64, %s65
    %p69 = pneg %p63
    %p70 = scmp.eq.s32.totalorder %s12, 2
    %p71 = por %p69, %p70
    %p72 = scmp.ne.s32.totalorder %s64, %s67
    %p73 = scmp.eq.s32.totalorder %s12, 0
    %p74 = por %p72, %p73
    %p75 = scmp.ne.s32.totalorder %s64, %s67
    %p76 = scmp.eq.s32.totalorder %s17, 2
    %p77 = por %p75, %p76
    %p78 = scmp.ne.s32.totalorder %s67, %s68
    %p79 = scmp.eq.s32.totalorder %s17, 0
    %p80 = por %p78, %p79
    %p81 = scmp.ne.s32.totalorder %s67, %s68
    %p82 = scmp.eq.s32.totalorder %s18, 2
    %p83 = por %p81, %p82
    %p85 = scmp.ne.s32.totalorder %s68, %s84
    %p86 = scmp.eq.s32.totalorder %s18, 0
    %p87 = por %p85, %p86
    %s88 = ssub.s32 %s12, %s19
    %p89 = scmp.eq.s32.totalorder %s88, 0
    %s91 = sadd.s32 %s90, 1
    %s92 = scalar_select %p89, %s90, %s91
    %p95 = pneg %p89
    %p96 = scmp.eq.s32.totalorder %s12, 2
    %p97 = por %p95, %p96
    %p98 = scmp.ne.s32.totalorder %s90, %s93
    %p99 = scmp.eq.s32.totalorder %s12, 0
    %p100 = por %p98, %p99
    %p101 = scmp.ne.s32.totalorder %s90, %s93
    %p102 = scmp.eq.s32.totalorder %s17, 2
    %p103 = por %p101, %p102
    %p104 = scmp.ne.s32.totalorder %s93, %s94
    %p105 = scmp.eq.s32.totalorder %s17, 0
    %p106 = por %p104, %p105
    %p107 = scmp.ne.s32.totalorder %s93, %s94
    %p108 = scmp.eq.s32.totalorder %s18, 2
    %p109 = por %p107, %p108
    %p111 = scmp.ne.s32.totalorder %s94, %s110
    %p112 = scmp.eq.s32.totalorder %s18, 0
    %p113 = por %p111, %p112
    %s114 = ssub.s32 %s12, %s19
    %p115 = scmp.eq.s32.totalorder %s114, 0
    %s117 = sadd.s32 %s116, 1
    %s118 = scalar_select %p115, %s116, %s117
    %p121 = pneg %p115
    %p122 = scmp.eq.s32.totalorder %s12, 2
    %p123 = por %p121, %p122
    %p124 = scmp.ne.s32.totalorder %s116, %s119
    %p125 = scmp.eq.s32.totalorder %s12, 0
    %p126 = por %p124, %p125
    %p127 = scmp.ne.s32.totalorder %s116, %s119
    %p128 = scmp.eq.s32.totalorder %s17, 2
    %p129 = por %p127, %p128
    %p130 = scmp.ne.s32.totalorder %s119, %s120
    %p131 = scmp.eq.s32.totalorder %s17, 0
    %p132 = por %p130, %p131
    %p133 = scmp.ne.s32.totalorder %s119, %s120
    %p134 = scmp.eq.s32.totalorder %s18, 2
    %p135 = por %p133, %p134
    %p137 = scmp.ne.s32.totalorder %s120, %s136
    %p138 = scmp.eq.s32.totalorder %s18, 0
    %p139 = por %p137, %p138
    %s140 = ssub.s32 %s12, %s19
    %p141 = scmp.eq.s32.totalorder %s140, 0
    %s143 = sadd.s32 %s142, 1
    %s144 = scalar_select %p141, %s142, %s143
    %p147 = pneg %p141
    %p148 = scmp.eq.s32.totalorder %s12, 2
    %p149 = por %p147, %p148
    %p150 = scmp.ne.s32.totalorder %s142, %s145
    %p151 = scmp.eq.s32.totalorder %s12, 0
    %p152 = por %p150, %p151
    %p153 = scmp.ne.s32.totalorder %s142, %s145
    %p154 = scmp.eq.s32.totalorder %s17, 2
    %p155 = por %p153, %p154
    %p156 = scmp.ne.s32.totalorder %s145, %s146
    %p157 = scmp.eq.s32.totalorder %s17, 0
    %p158 = por %p156, %p157
    %p159 = scmp.ne.s32.totalorder %s145, %s146
    %p160 = scmp.eq.s32.totalorder %s18, 2
    %p161 = por %p159, %p160
    %p163 = scmp.ne.s32.totalorder %s146, %s162
    %p164 = scmp.eq.s32.totalorder %s18, 0
    %p165 = por %p163, %p164
    %s166 = ssub.s32 %s12, %s19
    %p167 = scmp.eq.s32.totalorder %s166, 0
    %s169 = sadd.s32 %s168, 1
    %s170 = scalar_select %p167, %s168, %s169
    %p173 = pneg %p167
    %p174 = scmp.eq.s32.totalorder %s12, 2
    %p175 = por %p173, %p174
    %p176 = scmp.ne.s32.totalorder %s168, %s171
    %p177 = scmp.eq.s32.totalorder %s12, 0
    %p178 = por %p176, %p177
    %p179 = scmp.ne.s32.totalorder %s168, %s171
    %p180 = scmp.eq.s32.totalorder %s17, 2
    %p181 = por %p179, %p180
    %p182 = scmp.ne.s32.totalorder %s171, %s172
    %p183 = scmp.eq.s32.totalorder %s17, 0
    %p184 = por %p182, %p183
    %p185 = scmp.ne.s32.totalorder %s171, %s172
    %p186 = scmp.eq.s32.totalorder %s18, 2
    %p187 = por %p185, %p186
    %p189 = scmp.ne.s32.totalorder %s172, %s188
    %p190 = scmp.eq.s32.totalorder %s18, 0
    %p191 = por %p189, %p190
    %p192 = scmp.le.s32.totalorder 1, %s12
    %p193 = scmp.lt.s32.totalorder %s12, 4
    %p194 = pnand %p192, %p193
    %p195 = pneg %p194
    // Predicated region
    $region9: #{gin_encoder_forward.1} parent=5 // pred_check
      _
    $region10: #{gin_encoder_forward.1} parent=5 // pred_check_branch
      %197 = sbr.rel (%p194) target = $region12
    $region11: #{gin_encoder_forward.1} parent=5 // pred_region
      %s198 = ssub.s32 %s12, 1
      // Predicated region
      $region13: #{gin_encoder_forward.1} parent=11 // pred_check
        %p199 = pneg %p33
      $region14: #{gin_encoder_forward.1} parent=11 // pred_check_branch
        %201 = sbr.rel (%p199) target = $region16
      $region15: #{gin_encoder_forward.1} parent=11 // pred_region
        _
      $region16: #{gin_encoder_forward.1} parent=11 // pred_fallthru
        _
      // Predicated region
      $region17: #{gin_encoder_forward.1} parent=11 // pred_check
        %p202 = pneg %p54
      $region18: #{gin_encoder_forward.1} parent=11 // pred_check_branch
        %204 = sbr.rel (%p202) target = $region20
      $region19: #{gin_encoder_forward.1} parent=11 // pred_region
        _
      $region20: #{gin_encoder_forward.1} parent=11 // pred_fallthru
        _
    $region12: #{gin_encoder_forward.1} parent=5 // pred_fallthru
      _
    %p205 = scmp.lt.s32.totalorder %s12, 3
    // Predicated region
    $region21: #{gin_encoder_forward.1} parent=5 // pred_check
      %p206 = pneg %p205
    $region22: #{gin_encoder_forward.1} parent=5 // pred_check_branch
      %208 = sbr.rel (%p206) target = $region24
    $region23: #{gin_encoder_forward.1} parent=5 // pred_region
      // Predicated region
      $region25: #{gin_encoder_forward.1} parent=23 // pred_check
        %p209 = pneg %p74
      $region26: #{gin_encoder_forward.1} parent=23 // pred_check_branch
        %211 = sbr.rel (%p209) target = $region28
      $region27: #{gin_encoder_forward.1} parent=23 // pred_region
        %p212 = scmp.lt.s32.totalorder %s12, 2
        %s213 = scalar_select %p212, %s12, 2
        %s214 = smul.addr %s213, 16
        %s215 = smul.addr %s214, 4
        %s216 = scalar_lea.vmem %s2, %s215
      $region28: #{gin_encoder_forward.1} parent=23 // pred_fallthru
        _
      // Predicated region
      $region29: #{gin_encoder_forward.1} parent=23 // pred_check
        %p217 = pneg %p100
      $region30: #{gin_encoder_forward.1} parent=23 // pred_check_branch
        %219 = sbr.rel (%p217) target = $region32
      $region31: #{gin_encoder_forward.1} parent=23 // pred_region
        %p220 = scmp.lt.s32.totalorder %s12, 2
        %s221 = scalar_select %p220, %s12, 2
        %s222 = scalar_lea.vmem %s3, %s221
      $region32: #{gin_encoder_forward.1} parent=23 // pred_fallthru
        _
      // Predicated region
      $region33: #{gin_encoder_forward.1} parent=23 // pred_check
        %p223 = pneg %p126
      $region34: #{gin_encoder_forward.1} parent=23 // pred_check_branch
        %225 = sbr.rel (%p223) target = $region36
      $region35: #{gin_encoder_forward.1} parent=23 // pred_region
        %p226 = scmp.lt.s32.totalorder %s12, 2
        %s227 = scalar_select %p226, %s12, 2
        %s228 = smul.addr %s227, 16
        %s229 = smul.addr %s228, 4
        %s230 = scalar_lea.vmem %s4, %s229
      $region36: #{gin_encoder_forward.1} parent=23 // pred_fallthru
        _
      // Predicated region
      $region37: #{gin_encoder_forward.1} parent=23 // pred_check
        %p231 = pneg %p152
      $region38: #{gin_encoder_forward.1} parent=23 // pred_check_branch
        %233 = sbr.rel (%p231) target = $region40
      $region39: #{gin_encoder_forward.1} parent=23 // pred_region
        %p234 = scmp.lt.s32.totalorder %s12, 2
        %s235 = scalar_select %p234, %s12, 2
        %s236 = scalar_lea.vmem %s5, %s235
      $region40: #{gin_encoder_forward.1} parent=23 // pred_fallthru
        _
    $region24: #{gin_encoder_forward.1} parent=5 // pred_fallthru
      _
    %p237 = scmp.le.s32.totalorder 1, %s12
    %p238 = scmp.lt.s32.totalorder %s12, 4
    %p239 = pnand %p237, %p238
    %p240 = pneg %p239
    // Predicated region
    $region41: #{gin_encoder_forward.1} parent=5 // pred_check
      _
    $region42: #{gin_encoder_forward.1} parent=5 // pred_check_branch
      %242 = sbr.rel (%p239) target = $region44
    $region43: #{gin_encoder_forward.1} parent=5 // pred_region
      %s243 = ssub.s32 %s12, 1
      %p244 = pneg %p33
      %p245 = pneg %p30
      %p246 = pneg %p54
      %p247 = pneg %p51
      %p248 = scmp.lt.s32.totalorder %s17, 2
      %s249 = scalar_select %p248, %s17, 2
      %s250 = smul.addr %s249, 16
      %s251 = smul.addr %s250, 4
      %s252 = scalar_lea.vmem %s2, %s251
      %p253 = pneg %p80
      %p254 = pneg %p77
      %p255 = scmp.lt.s32.totalorder %s17, 2
      %s256 = scalar_select %p255, %s17, 2
      %s257 = scalar_lea.vmem %s3, %s256
      %p258 = pneg %p106
      %p259 = pneg %p103
      %p260 = scmp.lt.s32.totalorder %s17, 2
      %s261 = scalar_select %p260, %s17, 2
      %s262 = smul.addr %s261, 16
      %s263 = smul.addr %s262, 4
      %s264 = scalar_lea.vmem %s4, %s263
      %p265 = pneg %p132
      %p266 = pneg %p129
      %p267 = scmp.lt.s32.totalorder %s17, 2
      %s268 = scalar_select %p267, %s17, 2
      %s269 = scalar_lea.vmem %s5, %s268
      %p270 = pneg %p158
      %p271 = pneg %p155
      %p272 = pneg %p184
      %p273 = pneg %p181
      %p274 = scmp.lt.s32.totalorder %s17, 2
      %s275 = scalar_select %p274, %s17, 2
      %s276 = smul.addr %s275, 64
      %s277 = smul.addr %s276, 4
      %s278 = scalar_lea.vmem %s6, %s277
      %p279 = scmp.lt.s32.totalorder %s17, 2
      %s280 = scalar_select %p279, %s17, 2
      %s281 = smul.addr %s280, 16
      %s282 = smul.addr %s281, 4
      %s283 = scalar_lea.vmem %s2, %s282
      %p284 = scmp.lt.s32.totalorder %s17, 2
      %s285 = scalar_select %p284, %s17, 2
      %s286 = scalar_lea.vmem %s3, %s285
      %p287 = scmp.lt.s32.totalorder %s17, 2
      %s288 = scalar_select %p287, %s17, 2
      %s289 = smul.addr %s288, 16
      %s290 = smul.addr %s289, 4
      %s291 = scalar_lea.vmem %s4, %s290
      %p292 = scmp.lt.s32.totalorder %s17, 2
      %s293 = scalar_select %p292, %s17, 2
      %s294 = scalar_lea.vmem %s5, %s293
      %p295 = scmp.lt.s32.totalorder %s17, 2
      %s296 = scalar_select %p295, %s17, 2
      %s297 = smul.addr %s296, 64
      %s298 = smul.addr %s297, 4
      %s299 = scalar_lea.vmem %s6, %s298
      %p301 = scmp.eq.s32.totalorder %s17, 0
      // Predicated region
      $region45: #{gin_encoder_forward.1} parent=43 // pred_check
        %p302 = pneg %p301
      $region46: #{gin_encoder_forward.1} parent=43 // pred_check_branch
        %304 = sbr.rel (%p302) target = $region48
      $region47: #{gin_encoder_forward.1} parent=43 // pred_region
        %v305 = vld [vmem:[%s1] sm:$0xf]
        %v306 = vld [vmem:[%s1 + $0x4] sm:$0xf]
        %v307 = vld [vmem:[%s1 + $0x8] sm:$0xf]
        %v308 = vld [vmem:[%s1 + $0xc] sm:$0xf]
        %v309 = vld [vmem:[%s1 + $0x10] sm:$0xf]
        %v310 = vld [vmem:[%s1 + $0x14] sm:$0xf]
        %v311 = vld [vmem:[%s1 + $0x18] sm:$0xf]
        %v312 = vld [vmem:[%s1 + $0x1c] sm:$0xf]
        %v313 = vld [vmem:[%s1 + $0x20] sm:$0xf]
        %v314 = vld [vmem:[%s1 + $0x24] sm:$0xf]
        %v315 = vld [vmem:[%s1 + $0x28] sm:$0xf]
        %v316 = vld [vmem:[%s1 + $0x2c] sm:$0xf]
        %v317 = vld [vmem:[%s1 + $0x30] sm:$0xf]
        %v318 = vld [vmem:[%s1 + $0x34] sm:$0xf]
        %v319 = vld [vmem:[%s1 + $0x38] sm:$0xf]
        %v320 = vld [vmem:[%s1 + $0x3c] sm:$0xf]
        %v321 = vld [vmem:[%s1 + $0x40] sm:$0xf]
        %v322 = vld [vmem:[%s1 + $0x44] sm:$0xf]
        %v323 = vld [vmem:[%s1 + $0x48] sm:$0xf]
        %v324 = vld [vmem:[%s1 + $0x4c] sm:$0xf]
        %v325 = vld [vmem:[%s1 + $0x50] sm:$0xf]
        %v326 = vld [vmem:[%s1 + $0x54] sm:$0xf]
        %v327 = vld [vmem:[%s1 + $0x58] sm:$0xf]
        %v328 = vld [vmem:[%s1 + $0x5c] sm:$0xf]
        %v329 = vld [vmem:[%s1 + $0x60] sm:$0xf]
        %v330 = vld [vmem:[%s1 + $0x64] sm:$0xf]
        %v331 = vld [vmem:[%s1 + $0x68] sm:$0xf]
        %v332 = vld [vmem:[%s1 + $0x6c] sm:$0xf]
        %v333 = vld [vmem:[%s1 + $0x70] sm:$0xf]
        %v334 = vld [vmem:[%s1 + $0x74] sm:$0xf]
        %v335 = vld [vmem:[%s1 + $0x78] sm:$0xf]
        %v336 = vld [vmem:[%s1 + $0x7c] sm:$0xf]
        %v337 = vld [vmem:[%s1 + $0x80] sm:$0xf]
        %v338 = vld [vmem:[%s1 + $0x84] sm:$0xf]
        %v339 = vld [vmem:[%s1 + $0x88] sm:$0xf]
        %v340 = vld [vmem:[%s1 + $0x8c] sm:$0xf]
        %v341 = vld [vmem:[%s1 + $0x90] sm:$0xf]
        %v342 = vld [vmem:[%s1 + $0x94] sm:$0xf]
        %v343 = vld [vmem:[%s1 + $0x98] sm:$0xf]
        %v344 = vld [vmem:[%s1 + $0x9c] sm:$0xf]
        %v345 = vld [vmem:[%s1 + $0xa0] sm:$0xf]
        %v346 = vld [vmem:[%s1 + $0xa4] sm:$0xf]
        %v347 = vld [vmem:[%s1 + $0xa8] sm:$0xf]
        %v348 = vld [vmem:[%s1 + $0xac] sm:$0xf]
        %v349 = vld [vmem:[%s1 + $0xb0] sm:$0xf]
        %v350 = vld [vmem:[%s1 + $0xb4] sm:$0xf]
        %v351 = vld [vmem:[%s1 + $0xb8] sm:$0xf]
        %v352 = vld [vmem:[%s1 + $0xbc] sm:$0xf]
        %v353 = vld [vmem:[%s1 + $0xc0] sm:$0xf]
        %v354 = vld [vmem:[%s1 + $0xc4] sm:$0xf]
        %v355 = vld [vmem:[%s1 + $0xc8] sm:$0xf]
        %v356 = vld [vmem:[%s1 + $0xcc] sm:$0xf]
        %v357 = vld [vmem:[%s1 + $0xd0] sm:$0xf]
        %v358 = vld [vmem:[%s1 + $0xd4] sm:$0xf]
        %v359 = vld [vmem:[%s1 + $0xd8] sm:$0xf]
        %v360 = vld [vmem:[%s1 + $0xdc] sm:$0xf]
        %v361 = vld [vmem:[%s1 + $0xe0] sm:$0xf]
        %v362 = vld [vmem:[%s1 + $0xe4] sm:$0xf]
        %v363 = vld [vmem:[%s1 + $0xe8] sm:$0xf]
        %v364 = vld [vmem:[%s1 + $0xec] sm:$0xf]
        %v365 = vld [vmem:[%s1 + $0xf0] sm:$0xf]
        %v366 = vld [vmem:[%s1 + $0xf4] sm:$0xf]
        %v367 = vld [vmem:[%s1 + $0xf8] sm:$0xf]
        %v368 = vld [vmem:[%s1 + $0xfc] sm:$0xf]
        %369 = vst [vmem:[#allocation2] sm:$0xf] %v305
        %370 = vst [vmem:[#allocation2 + $0x4] sm:$0xf] %v306
        %371 = vst [vmem:[#allocation2 + $0x8] sm:$0xf] %v307
        %372 = vst [vmem:[#allocation2 + $0xc] sm:$0xf] %v308
        %373 = vst [vmem:[#allocation2 + $0x10] sm:$0xf] %v309
        %374 = vst [vmem:[#allocation2 + $0x14] sm:$0xf] %v310
        %375 = vst [vmem:[#allocation2 + $0x18] sm:$0xf] %v311
        %376 = vst [vmem:[#allocation2 + $0x1c] sm:$0xf] %v312
        %377 = vst [vmem:[#allocation2 + $0x20] sm:$0xf] %v313
        %378 = vst [vmem:[#allocation2 + $0x24] sm:$0xf] %v314
        %379 = vst [vmem:[#allocation2 + $0x28] sm:$0xf] %v315
        %380 = vst [vmem:[#allocation2 + $0x2c] sm:$0xf] %v316
        %381 = vst [vmem:[#allocation2 + $0x30] sm:$0xf] %v317
        %382 = vst [vmem:[#allocation2 + $0x34] sm:$0xf] %v318
        %383 = vst [vmem:[#allocation2 + $0x38] sm:$0xf] %v319
        %384 = vst [vmem:[#allocation2 + $0x3c] sm:$0xf] %v320
        %385 = vst [vmem:[#allocation2 + $0x40] sm:$0xf] %v321
        %386 = vst [vmem:[#allocation2 + $0x44] sm:$0xf] %v322
        %387 = vst [vmem:[#allocation2 + $0x48] sm:$0xf] %v323
        %388 = vst [vmem:[#allocation2 + $0x4c] sm:$0xf] %v324
        %389 = vst [vmem:[#allocation2 + $0x50] sm:$0xf] %v325
        %390 = vst [vmem:[#allocation2 + $0x54] sm:$0xf] %v326
        %391 = vst [vmem:[#allocation2 + $0x58] sm:$0xf] %v327
        %392 = vst [vmem:[#allocation2 + $0x5c] sm:$0xf] %v328
        %393 = vst [vmem:[#allocation2 + $0x60] sm:$0xf] %v329
        %394 = vst [vmem:[#allocation2 + $0x64] sm:$0xf] %v330
        %395 = vst [vmem:[#allocation2 + $0x68] sm:$0xf] %v331
        %396 = vst [vmem:[#allocation2 + $0x6c] sm:$0xf] %v332
        %397 = vst [vmem:[#allocation2 + $0x70] sm:$0xf] %v333
        %398 = vst [vmem:[#allocation2 + $0x74] sm:$0xf] %v334
        %399 = vst [vmem:[#allocation2 + $0x78] sm:$0xf] %v335
        %400 = vst [vmem:[#allocation2 + $0x7c] sm:$0xf] %v336
        %401 = vst [vmem:[#allocation2 + $0x80] sm:$0xf] %v337
        %402 = vst [vmem:[#allocation2 + $0x84] sm:$0xf] %v338
        %403 = vst [vmem:[#allocation2 + $0x88] sm:$0xf] %v339
        %404 = vst [vmem:[#allocation2 + $0x8c] sm:$0xf] %v340
        %405 = vst [vmem:[#allocation2 + $0x90] sm:$0xf] %v341
        %406 = vst [vmem:[#allocation2 + $0x94] sm:$0xf] %v342
        %407 = vst [vmem:[#allocation2 + $0x98] sm:$0xf] %v343
        %408 = vst [vmem:[#allocation2 + $0x9c] sm:$0xf] %v344
        %409 = vst [vmem:[#allocation2 + $0xa0] sm:$0xf] %v345
        %410 = vst [vmem:[#allocation2 + $0xa4] sm:$0xf] %v346
        %411 = vst [vmem:[#allocation2 + $0xa8] sm:$0xf] %v347
        %412 = vst [vmem:[#allocation2 + $0xac] sm:$0xf] %v348
        %413 = vst [vmem:[#allocation2 + $0xb0] sm:$0xf] %v349
        %414 = vst [vmem:[#allocation2 + $0xb4] sm:$0xf] %v350
        %415 = vst [vmem:[#allocation2 + $0xb8] sm:$0xf] %v351
        %416 = vst [vmem:[#allocation2 + $0xbc] sm:$0xf] %v352
        %417 = vst [vmem:[#allocation2 + $0xc0] sm:$0xf] %v353
        %418 = vst [vmem:[#allocation2 + $0xc4] sm:$0xf] %v354
        %419 = vst [vmem:[#allocation2 + $0xc8] sm:$0xf] %v355
        %420 = vst [vmem:[#allocation2 + $0xcc] sm:$0xf] %v356
        %421 = vst [vmem:[#allocation2 + $0xd0] sm:$0xf] %v357
        %422 = vst [vmem:[#allocation2 + $0xd4] sm:$0xf] %v358
        %423 = vst [vmem:[#allocation2 + $0xd8] sm:$0xf] %v359
        %424 = vst [vmem:[#allocation2 + $0xdc] sm:$0xf] %v360
        %425 = vst [vmem:[#allocation2 + $0xe0] sm:$0xf] %v361
        %426 = vst [vmem:[#allocation2 + $0xe4] sm:$0xf] %v362
        %427 = vst [vmem:[#allocation2 + $0xe8] sm:$0xf] %v363
        %428 = vst [vmem:[#allocation2 + $0xec] sm:$0xf] %v364
        %429 = vst [vmem:[#allocation2 + $0xf0] sm:$0xf] %v365
        %430 = vst [vmem:[#allocation2 + $0xf4] sm:$0xf] %v366
        %431 = vst [vmem:[#allocation2 + $0xf8] sm:$0xf] %v367
        %432 = vst [vmem:[#allocation2 + $0xfc] sm:$0xf] %v368
      $region48: #{gin_encoder_forward.1} parent=43 // pred_fallthru
        _
      %v433 = vld [vmem:[%s0] sm:$0xff]
      %v434 = vld [vmem:[%s0 + $0x8] sm:$0xff]
      %v435 = vld [vmem:[%s0 + $0x10] sm:$0xff]
      %v436 = vld [vmem:[%s0 + $0x18] sm:$0xff]
      %v437 = vld [vmem:[%s0 + $0x20] sm:$0xff]
      %v438 = vld [vmem:[%s0 + $0x28] sm:$0xff]
      %v439 = vld [vmem:[%s0 + $0x30] sm:$0xff]
      %v440 = vld [vmem:[%s0 + $0x38] sm:$0xff]
      %v441 = vld [vmem:[%s0 + $0x40] sm:$0xff]
      %v442 = vld [vmem:[%s0 + $0x48] sm:$0xff]
      %v443 = vld [vmem:[%s0 + $0x50] sm:$0xff]
      %v444 = vld [vmem:[%s0 + $0x58] sm:$0xff]
      %v445 = vld [vmem:[%s0 + $0x60] sm:$0xff]
      %v446 = vld [vmem:[%s0 + $0x68] sm:$0xff]
      %v447 = vld [vmem:[%s0 + $0x70] sm:$0xff]
      %v448 = vld [vmem:[%s0 + $0x78] sm:$0xff]
      %v449 = vld [vmem:[%s0 + $0x80] sm:$0xff]
      %v450 = vld [vmem:[%s0 + $0x88] sm:$0xff]
      %v451 = vld [vmem:[%s0 + $0x90] sm:$0xff]
      %v452 = vld [vmem:[%s0 + $0x98] sm:$0xff]
      %v453 = vld [vmem:[%s0 + $0xa0] sm:$0xff]
      %v454 = vld [vmem:[%s0 + $0xa8] sm:$0xff]
      %v455 = vld [vmem:[%s0 + $0xb0] sm:$0xff]
      %v456 = vld [vmem:[%s0 + $0xb8] sm:$0xff]
      %v457 = vld [vmem:[%s0 + $0xc0] sm:$0xff]
      %v458 = vld [vmem:[%s0 + $0xc8] sm:$0xff]
      %v459 = vld [vmem:[%s0 + $0xd0] sm:$0xff]
      %v460 = vld [vmem:[%s0 + $0xd8] sm:$0xff]
      %v461 = vld [vmem:[%s0 + $0xe0] sm:$0xff]
      %v462 = vld [vmem:[%s0 + $0xe8] sm:$0xff]
      %v463 = vld [vmem:[%s0 + $0xf0] sm:$0xff]
      %v464 = vld [vmem:[%s0 + $0xf8] sm:$0xff]
      %v465 = vld [vmem:[%s0 + $0x100] sm:$0xff]
      %v466 = vld [vmem:[%s0 + $0x108] sm:$0xff]
      %v467 = vld [vmem:[%s0 + $0x110] sm:$0xff]
      %v468 = vld [vmem:[%s0 + $0x118] sm:$0xff]
      %v469 = vld [vmem:[%s0 + $0x120] sm:$0xff]
      %v470 = vld [vmem:[%s0 + $0x128] sm:$0xff]
      %v471 = vld [vmem:[%s0 + $0x130] sm:$0xff]
      %v472 = vld [vmem:[%s0 + $0x138] sm:$0xff]
      %v473 = vld [vmem:[%s0 + $0x140] sm:$0xff]
      %v474 = vld [vmem:[%s0 + $0x148] sm:$0xff]
      %v475 = vld [vmem:[%s0 + $0x150] sm:$0xff]
      %v476 = vld [vmem:[%s0 + $0x158] sm:$0xff]
      %v477 = vld [vmem:[%s0 + $0x160] sm:$0xff]
      %v478 = vld [vmem:[%s0 + $0x168] sm:$0xff]
      %v479 = vld [vmem:[%s0 + $0x170] sm:$0xff]
      %v480 = vld [vmem:[%s0 + $0x178] sm:$0xff]
      %v481 = vld [vmem:[%s0 + $0x180] sm:$0xff]
      %v482 = vld [vmem:[%s0 + $0x188] sm:$0xff]
      %v483 = vld [vmem:[%s0 + $0x190] sm:$0xff]
      %v484 = vld [vmem:[%s0 + $0x198] sm:$0xff]
      %v485 = vld [vmem:[%s0 + $0x1a0] sm:$0xff]
      %v486 = vld [vmem:[%s0 + $0x1a8] sm:$0xff]
      %v487 = vld [vmem:[%s0 + $0x1b0] sm:$0xff]
      %v488 = vld [vmem:[%s0 + $0x1b8] sm:$0xff]
      %v489 = vld [vmem:[%s0 + $0x1c0] sm:$0xff]
      %v490 = vld [vmem:[%s0 + $0x1c8] sm:$0xff]
      %v491 = vld [vmem:[%s0 + $0x1d0] sm:$0xff]
      %v492 = vld [vmem:[%s0 + $0x1d8] sm:$0xff]
      %v493 = vld [vmem:[%s0 + $0x1e0] sm:$0xff]
      %v494 = vld [vmem:[%s0 + $0x1e8] sm:$0xff]
      %v495 = vld [vmem:[%s0 + $0x1f0] sm:$0xff]
      %v496 = vld [vmem:[%s0 + $0x1f8] sm:$0xff]
      %v497 = vunpack.c.l.s8.bf16 %v433
      %v498 = vunpack.c.l.s8.bf16 %v434
      %v499 = vunpack.c.l.s8.bf16 %v435
      %v500 = vunpack.c.l.s8.bf16 %v436
      %v501 = vunpack.c.h.s8.bf16 %v433
      %v502 = vunpack.c.h.s8.bf16 %v434
      %v503 = vunpack.c.h.s8.bf16 %v435
      %v504 = vunpack.c.h.s8.bf16 %v436
      %v505 = vunpack.c.l.s8.bf16 %v437
      %v506 = vunpack.c.l.s8.bf16 %v438
      %v507 = vunpack.c.l.s8.bf16 %v439
      %v508 = vunpack.c.l.s8.bf16 %v440
      %v509 = vunpack.c.h.s8.bf16 %v437
      %v510 = vunpack.c.h.s8.bf16 %v438
      %v511 = vunpack.c.h.s8.bf16 %v439
      %v512 = vunpack.c.h.s8.bf16 %v440
      %v513 = vunpack.c.l.s8.bf16 %v441
      %v514 = vunpack.c.l.s8.bf16 %v442
      %v515 = vunpack.c.l.s8.bf16 %v443
      %v516 = vunpack.c.l.s8.bf16 %v444
      %v517 = vunpack.c.h.s8.bf16 %v441
      %v518 = vunpack.c.h.s8.bf16 %v442
      %v519 = vunpack.c.h.s8.bf16 %v443
      %v520 = vunpack.c.h.s8.bf16 %v444
      %v521 = vunpack.c.l.s8.bf16 %v445
      %v522 = vunpack.c.l.s8.bf16 %v446
      %v523 = vunpack.c.l.s8.bf16 %v447
      %v524 = vunpack.c.l.s8.bf16 %v448
      %v525 = vunpack.c.h.s8.bf16 %v445
      %v526 = vunpack.c.h.s8.bf16 %v446
      %v527 = vunpack.c.h.s8.bf16 %v447
      %v528 = vunpack.c.h.s8.bf16 %v448
      %v529 = vunpack.c.l.s8.bf16 %v449
      %v530 = vunpack.c.l.s8.bf16 %v450
      %v531 = vunpack.c.l.s8.bf16 %v451
      %v532 = vunpack.c.l.s8.bf16 %v452
      %v533 = vunpack.c.h.s8.bf16 %v449
      %v534 = vunpack.c.h.s8.bf16 %v450
      %v535 = vunpack.c.h.s8.bf16 %v451
      %v536 = vunpack.c.h.s8.bf16 %v452
      %v537 = vunpack.c.l.s8.bf16 %v453
      %v538 = vunpack.c.l.s8.bf16 %v454
      %v539 = vunpack.c.l.s8.bf16 %v455
      %v540 = vunpack.c.l.s8.bf16 %v456
      %v541 = vunpack.c.h.s8.bf16 %v453
      %v542 = vunpack.c.h.s8.bf16 %v454
      %v543 = vunpack.c.h.s8.bf16 %v455
      %v544 = vunpack.c.h.s8.bf16 %v456
      %v545 = vunpack.c.l.s8.bf16 %v457
      %v546 = vunpack.c.l.s8.bf16 %v458
      %v547 = vunpack.c.l.s8.bf16 %v459
      %v548 = vunpack.c.l.s8.bf16 %v460
      %v549 = vunpack.c.h.s8.bf16 %v457
      %v550 = vunpack.c.h.s8.bf16 %v458
      %v551 = vunpack.c.h.s8.bf16 %v459
      %v552 = vunpack.c.h.s8.bf16 %v460
      %v553 = vunpack.c.l.s8.bf16 %v461
      %v554 = vunpack.c.l.s8.bf16 %v462
      %v555 = vunpack.c.l.s8.bf16 %v463
      %v556 = vunpack.c.l.s8.bf16 %v464
      %v557 = vunpack.c.h.s8.bf16 %v461
      %v558 = vunpack.c.h.s8.bf16 %v462
      %v559 = vunpack.c.h.s8.bf16 %v463
      %v560 = vunpack.c.h.s8.bf16 %v464
      %v561 = vunpack.c.l.s8.bf16 %v465
      %v562 = vunpack.c.l.s8.bf16 %v466
      %v563 = vunpack.c.l.s8.bf16 %v467
      %v564 = vunpack.c.l.s8.bf16 %v468
      %v565 = vunpack.c.h.s8.bf16 %v465
      %v566 = vunpack.c.h.s8.bf16 %v466
      %v567 = vunpack.c.h.s8.bf16 %v467
      %v568 = vunpack.c.h.s8.bf16 %v468
      %v569 = vunpack.c.l.s8.bf16 %v469
      %v570 = vunpack.c.l.s8.bf16 %v470
      %v571 = vunpack.c.l.s8.bf16 %v471
      %v572 = vunpack.c.l.s8.bf16 %v472
      %v573 = vunpack.c.h.s8.bf16 %v469
      %v574 = vunpack.c.h.s8.bf16 %v470
      %v575 = vunpack.c.h.s8.bf16 %v471
      %v576 = vunpack.c.h.s8.bf16 %v472
      %v577 = vunpack.c.l.s8.bf16 %v473
      %v578 = vunpack.c.l.s8.bf16 %v474
      %v579 = vunpack.c.l.s8.bf16 %v475
      %v580 = vunpack.c.l.s8.bf16 %v476
      %v581 = vunpack.c.h.s8.bf16 %v473
      %v582 = vunpack.c.h.s8.bf16 %v474
      %v583 = vunpack.c.h.s8.bf16 %v475
      %v584 = vunpack.c.h.s8.bf16 %v476
      %v585 = vunpack.c.l.s8.bf16 %v477
      %v586 = vunpack.c.l.s8.bf16 %v478
      %v587 = vunpack.c.l.s8.bf16 %v479
      %v588 = vunpack.c.l.s8.bf16 %v480
      %v589 = vunpack.c.h.s8.bf16 %v477
      %v590 = vunpack.c.h.s8.bf16 %v478
      %v591 = vunpack.c.h.s8.bf16 %v479
      %v592 = vunpack.c.h.s8.bf16 %v480
      %v593 = vunpack.c.l.s8.bf16 %v481
      %v594 = vunpack.c.l.s8.bf16 %v482
      %v595 = vunpack.c.l.s8.bf16 %v483
      %v596 = vunpack.c.l.s8.bf16 %v484
      %v597 = vunpack.c.h.s8.bf16 %v481
      %v598 = vunpack.c.h.s8.bf16 %v482
      %v599 = vunpack.c.h.s8.bf16 %v483
      %v600 = vunpack.c.h.s8.bf16 %v484
      %v601 = vunpack.c.l.s8.bf16 %v485
      %v602 = vunpack.c.l.s8.bf16 %v486
      %v603 = vunpack.c.l.s8.bf16 %v487
      %v604 = vunpack.c.l.s8.bf16 %v488
      %v605 = vunpack.c.h.s8.bf16 %v485
      %v606 = vunpack.c.h.s8.bf16 %v486
      %v607 = vunpack.c.h.s8.bf16 %v487
      %v608 = vunpack.c.h.s8.bf16 %v488
      %v609 = vunpack.c.l.s8.bf16 %v489
      %v610 = vunpack.c.l.s8.bf16 %v490
      %v611 = vunpack.c.l.s8.bf16 %v491
      %v612 = vunpack.c.l.s8.bf16 %v492
      %v613 = vunpack.c.h.s8.bf16 %v489
      %v614 = vunpack.c.h.s8.bf16 %v490
      %v615 = vunpack.c.h.s8.bf16 %v491
      %v616 = vunpack.c.h.s8.bf16 %v492
      %v617 = vunpack.c.l.s8.bf16 %v493
      %v618 = vunpack.c.l.s8.bf16 %v494
      %v619 = vunpack.c.l.s8.bf16 %v495
      %v620 = vunpack.c.l.s8.bf16 %v496
      %v621 = vunpack.c.h.s8.bf16 %v493
      %v622 = vunpack.c.h.s8.bf16 %v494
      %v623 = vunpack.c.h.s8.bf16 %v495
      %v624 = vunpack.c.h.s8.bf16 %v496
      %v625 = vld [vmem:[#allocation2] sm:$0xf]
      %v626 = vld [vmem:[#allocation2 + $0x4] sm:$0xf]
      %v627 = vld [vmem:[#allocation2 + $0x8] sm:$0xf]
      %v628 = vld [vmem:[#allocation2 + $0xc] sm:$0xf]
      %v629 = vld [vmem:[#allocation2 + $0x10] sm:$0xf]
      %v630 = vld [vmem:[#allocation2 + $0x14] sm:$0xf]
      %v631 = vld [vmem:[#allocation2 + $0x18] sm:$0xf]
      %v632 = vld [vmem:[#allocation2 + $0x1c] sm:$0xf]
      %v633 = vld [vmem:[#allocation2 + $0x20] sm:$0xf]
      %v634 = vld [vmem:[#allocation2 + $0x24] sm:$0xf]
      %v635 = vld [vmem:[#allocation2 + $0x28] sm:$0xf]
      %v636 = vld [vmem:[#allocation2 + $0x2c] sm:$0xf]
      %v637 = vld [vmem:[#allocation2 + $0x30] sm:$0xf]
      %v638 = vld [vmem:[#allocation2 + $0x34] sm:$0xf]
      %v639 = vld [vmem:[#allocation2 + $0x38] sm:$0xf]
      %v640 = vld [vmem:[#allocation2 + $0x3c] sm:$0xf]
      %v641 = vld [vmem:[#allocation2 + $0x40] sm:$0xf]
      %v642 = vld [vmem:[#allocation2 + $0x44] sm:$0xf]
      %v643 = vld [vmem:[#allocation2 + $0x48] sm:$0xf]
      %v644 = vld [vmem:[#allocation2 + $0x4c] sm:$0xf]
      %v645 = vld [vmem:[#allocation2 + $0x50] sm:$0xf]
      %v646 = vld [vmem:[#allocation2 + $0x54] sm:$0xf]
      %v647 = vld [vmem:[#allocation2 + $0x58] sm:$0xf]
      %v648 = vld [vmem:[#allocation2 + $0x5c] sm:$0xf]
      %v649 = vld [vmem:[#allocation2 + $0x60] sm:$0xf]
      %v650 = vld [vmem:[#allocation2 + $0x64] sm:$0xf]
      %v651 = vld [vmem:[#allocation2 + $0x68] sm:$0xf]
      %v652 = vld [vmem:[#allocation2 + $0x6c] sm:$0xf]
      %v653 = vld [vmem:[#allocation2 + $0x70] sm:$0xf]
      %v654 = vld [vmem:[#allocation2 + $0x74] sm:$0xf]
      %v655 = vld [vmem:[#allocation2 + $0x78] sm:$0xf]
      %v656 = vld [vmem:[#allocation2 + $0x7c] sm:$0xf]
      %v657 = vld [vmem:[#allocation2 + $0x80] sm:$0xf]
      %v658 = vld [vmem:[#allocation2 + $0x84] sm:$0xf]
      %v659 = vld [vmem:[#allocation2 + $0x88] sm:$0xf]
      %v660 = vld [vmem:[#allocation2 + $0x8c] sm:$0xf]
      %v661 = vld [vmem:[#allocation2 + $0x90] sm:$0xf]
      %v662 = vld [vmem:[#allocation2 + $0x94] sm:$0xf]
      %v663 = vld [vmem:[#allocation2 + $0x98] sm:$0xf]
      %v664 = vld [vmem:[#allocation2 + $0x9c] sm:$0xf]
      %v665 = vld [vmem:[#allocation2 + $0xa0] sm:$0xf]
      %v666 = vld [vmem:[#allocation2 + $0xa4] sm:$0xf]
      %v667 = vld [vmem:[#allocation2 + $0xa8] sm:$0xf]
      %v668 = vld [vmem:[#allocation2 + $0xac] sm:$0xf]
      %v669 = vld [vmem:[#allocation2 + $0xb0] sm:$0xf]
      %v670 = vld [vmem:[#allocation2 + $0xb4] sm:$0xf]
      %v671 = vld [vmem:[#allocation2 + $0xb8] sm:$0xf]
      %v672 = vld [vmem:[#allocation2 + $0xbc] sm:$0xf]
      %v673 = vld [vmem:[#allocation2 + $0xc0] sm:$0xf]
      %v674 = vld [vmem:[#allocation2 + $0xc4] sm:$0xf]
      %v675 = vld [vmem:[#allocation2 + $0xc8] sm:$0xf]
      %v676 = vld [vmem:[#allocation2 + $0xcc] sm:$0xf]
      %v677 = vld [vmem:[#allocation2 + $0xd0] sm:$0xf]
      %v678 = vld [vmem:[#allocation2 + $0xd4] sm:$0xf]
      %v679 = vld [vmem:[#allocation2 + $0xd8] sm:$0xf]
      %v680 = vld [vmem:[#allocation2 + $0xdc] sm:$0xf]
      %v681 = vld [vmem:[#allocation2 + $0xe0] sm:$0xf]
      %v682 = vld [vmem:[#allocation2 + $0xe4] sm:$0xf]
      %v683 = vld [vmem:[#allocation2 + $0xe8] sm:$0xf]
      %v684 = vld [vmem:[#allocation2 + $0xec] sm:$0xf]
      %v685 = vld [vmem:[#allocation2 + $0xf0] sm:$0xf]
      %v686 = vld [vmem:[#allocation2 + $0xf4] sm:$0xf]
      %v687 = vld [vmem:[#allocation2 + $0xf8] sm:$0xf]
      %v688 = vld [vmem:[#allocation2 + $0xfc] sm:$0xf]
      %v753 = vunpack.c.l.b16 %v625
      %v754 = vunpack.c.l.b16 %v626
      %v755 = vunpack.c.l.b16 %v627
      %v756 = vunpack.c.l.b16 %v628
      %v757 = vunpack.c.l.b16 %v629
      %v758 = vunpack.c.l.b16 %v630
      %v759 = vunpack.c.l.b16 %v631
      %v760 = vunpack.c.l.b16 %v632
      %v761 = vunpack.c.l.b16 %v633
      %v762 = vunpack.c.l.b16 %v634
      %v763 = vunpack.c.l.b16 %v635
      %v764 = vunpack.c.l.b16 %v636
      %v765 = vunpack.c.l.b16 %v637
      %v766 = vunpack.c.l.b16 %v638
      %v767 = vunpack.c.l.b16 %v639
      %v768 = vunpack.c.l.b16 %v640
      %v769 = vunpack.c.l.b16 %v641
      %v770 = vunpack.c.l.b16 %v642
      %v771 = vunpack.c.l.b16 %v643
      %v772 = vunpack.c.l.b16 %v644
      %v773 = vunpack.c.l.b16 %v645
      %v774 = vunpack.c.l.b16 %v646
      %v775 = vunpack.c.l.b16 %v647
      %v776 = vunpack.c.l.b16 %v648
      %v777 = vunpack.c.l.b16 %v649
      %v778 = vunpack.c.l.b16 %v650
      %v779 = vunpack.c.l.b16 %v651
      %v780 = vunpack.c.l.b16 %v652
      %v781 = vunpack.c.l.b16 %v653
      %v782 = vunpack.c.l.b16 %v654
      %v783 = vunpack.c.l.b16 %v655
      %v784 = vunpack.c.l.b16 %v656
      %v785 = vunpack.c.l.b16 %v657
      %v786 = vunpack.c.l.b16 %v658
      %v787 = vunpack.c.l.b16 %v659
      %v788 = vunpack.c.l.b16 %v660
      %v789 = vunpack.c.l.b16 %v661
      %v790 = vunpack.c.l.b16 %v662
      %v791 = vunpack.c.l.b16 %v663
      %v792 = vunpack.c.l.b16 %v664
      %v793 = vunpack.c.l.b16 %v665
      %v794 = vunpack.c.l.b16 %v666
      %v795 = vunpack.c.l.b16 %v667
      %v796 = vunpack.c.l.b16 %v668
      %v797 = vunpack.c.l.b16 %v669
      %v798 = vunpack.c.l.b16 %v670
      %v799 = vunpack.c.l.b16 %v671
      %v800 = vunpack.c.l.b16 %v672
      %v801 = vunpack.c.l.b16 %v673
      %v802 = vunpack.c.l.b16 %v674
      %v803 = vunpack.c.l.b16 %v675
      %v804 = vunpack.c.l.b16 %v676
      %v805 = vunpack.c.l.b16 %v677
      %v806 = vunpack.c.l.b16 %v678
      %v807 = vunpack.c.l.b16 %v679
      %v808 = vunpack.c.l.b16 %v680
      %v809 = vunpack.c.l.b16 %v681
      %v810 = vunpack.c.l.b16 %v682
      %v811 = vunpack.c.l.b16 %v683
      %v812 = vunpack.c.l.b16 %v684
      %v813 = vunpack.c.l.b16 %v685
      %v814 = vunpack.c.l.b16 %v686
      %v815 = vunpack.c.l.b16 %v687
      %v816 = vunpack.c.l.b16 %v688
      %v817 = vpack.c.b16 %v754, %v753
      %v818 = vpack.c.b16 %v756, %v755
      %v819 = vpack.c.b16 %v758, %v757
      %v820 = vpack.c.b16 %v760, %v759
      %v821 = vpack.c.b16 %v762, %v761
      %v822 = vpack.c.b16 %v764, %v763
      %v823 = vpack.c.b16 %v766, %v765
      %v824 = vpack.c.b16 %v768, %v767
      %v825 = vpack.c.b16 %v770, %v769
      %v826 = vpack.c.b16 %v772, %v771
      %v827 = vpack.c.b16 %v774, %v773
      %v828 = vpack.c.b16 %v776, %v775
      %v829 = vpack.c.b16 %v778, %v777
      %v830 = vpack.c.b16 %v780, %v779
      %v831 = vpack.c.b16 %v782, %v781
      %v832 = vpack.c.b16 %v784, %v783
      %v833 = vpack.c.b16 %v786, %v785
      %v834 = vpack.c.b16 %v788, %v787
      %v835 = vpack.c.b16 %v790, %v789
      %v836 = vpack.c.b16 %v792, %v791
      %v837 = vpack.c.b16 %v794, %v793
      %v838 = vpack.c.b16 %v796, %v795
      %v839 = vpack.c.b16 %v798, %v797
      %v840 = vpack.c.b16 %v800, %v799
      %v841 = vpack.c.b16 %v802, %v801
      %v842 = vpack.c.b16 %v804, %v803
      %v843 = vpack.c.b16 %v806, %v805
      %v844 = vpack.c.b16 %v808, %v807
      %v845 = vpack.c.b16 %v810, %v809
      %v846 = vpack.c.b16 %v812, %v811
      %v847 = vpack.c.b16 %v814, %v813
      %v848 = vpack.c.b16 %v816, %v815
      %881 = vmatprep.subr.bf16.mxu0 0
      %882 = vmatpush1.bf16.msra.mxu0 %v824
      %883 = vmatprep.subr.bf16.mxu0 0
      %884 = vmatpush1.bf16.msra.mxu0 %v823
      %885 = vmatprep.subr.bf16.mxu0 0
      %886 = vmatpush1.bf16.msra.mxu0 %v822
      %887 = vmatprep.subr.bf16.mxu0 0
      %888 = vmatpush1.bf16.msra.mxu0 %v821
      %889 = vmatprep.subr.bf16.mxu0 0
      %890 = vmatpush1.bf16.msra.mxu0 %v820
      %891 = vmatprep.subr.bf16.mxu0 0
      %892 = vmatpush1.bf16.msra.mxu0 %v819
      %893 = vmatprep.subr.bf16.mxu0 0
      %894 = vmatpush1.bf16.msra.mxu0 %v818
      %895 = vmatprep.subr.bf16.mxu0 0
      %896 = vmatpush1.bf16.msra.mxu0 %v817
      %897 = vmatprep.subr.bf16.mxu0 0
      %898 = vmatpush2.bf16.msra.mxu0 %v832
      %899 = vmatprep.subr.bf16.mxu0 0
      %900 = vmatpush2.bf16.msra.mxu0 %v831
      %901 = vmatprep.subr.bf16.mxu0 0
      %902 = vmatpush2.bf16.msra.mxu0 %v830
      %903 = vmatprep.subr.bf16.mxu0 0
      %904 = vmatpush2.bf16.msra.mxu0 %v829
      %905 = vmatprep.subr.bf16.mxu0 0
      %906 = vmatpush2.bf16.msra.mxu0 %v828
      %907 = vmatprep.subr.bf16.mxu0 0
      %908 = vmatpush2.bf16.msra.mxu0 %v827
      %909 = vmatprep.subr.bf16.mxu0 0
      %910 = vmatpush2.bf16.msra.mxu0 %v826
      %911 = vmatprep.subr.bf16.mxu0 0
      %912 = vmatpush2.bf16.msra.mxu0 %v825
      %913 = vmatprep.mubr.bf16.mxu0 %v498
      %914 = vmatmul.mubr.bf16.gmra.mxu0 %v497
      %v915 = vpop.f32.mrf.mxu0
      %v916 = vadd.f32 0.0, %v915
      %v917 = vpop.f32.mrf.mxu0
      %v918 = vpop.f32.mrf.mxu0
      %v919 = vadd.f32 0.0, %v918
      %v920 = vpop.f32.mrf.mxu0
      %921 = vmatprep.mubr.bf16.mxu0 %v502
      %922 = vmatmul.mubr.bf16.gmra.mxu0 %v501
      %v923 = vpop.f32.mrf.mxu0
      %v924 = vadd.f32 0.0, %v923
      %v925 = vpop.f32.mrf.mxu0
      %v926 = vpop.f32.mrf.mxu0
      %v927 = vadd.f32 0.0, %v926
      %v928 = vpop.f32.mrf.mxu0
      %929 = vmatprep.mubr.bf16.mxu0 %v506
      %930 = vmatmul.mubr.bf16.gmra.mxu0 %v505
      %v931 = vpop.f32.mrf.mxu0
      %v932 = vadd.f32 0.0, %v931
      %v933 = vpop.f32.mrf.mxu0
      %v934 = vpop.f32.mrf.mxu0
      %v935 = vadd.f32 0.0, %v934
      %v936 = vpop.f32.mrf.mxu0
      %937 = vmatprep.mubr.bf16.mxu0 %v510
      %938 = vmatmul.mubr.bf16.gmra.mxu0 %v509
      %v939 = vpop.f32.mrf.mxu0
      %v940 = vadd.f32 0.0, %v939
      %v941 = vpop.f32.mrf.mxu0
      %v942 = vpop.f32.mrf.mxu0
      %v943 = vadd.f32 0.0, %v942
      %v944 = vpop.f32.mrf.mxu0
      %945 = vmatprep.mubr.bf16.mxu0 %v514
      %946 = vmatmul.mubr.bf16.gmra.mxu0 %v513
      %v947 = vpop.f32.mrf.mxu0
      %v948 = vadd.f32 0.0, %v947
      %v949 = vpop.f32.mrf.mxu0
      %v950 = vpop.f32.mrf.mxu0
      %v951 = vadd.f32 0.0, %v950
      %v952 = vpop.f32.mrf.mxu0
      %953 = vmatprep.mubr.bf16.mxu0 %v518
      %954 = vmatmul.mubr.bf16.gmra.mxu0 %v517
      %v955 = vpop.f32.mrf.mxu0
      %v956 = vadd.f32 0.0, %v955
      %v957 = vpop.f32.mrf.mxu0
      %v958 = vpop.f32.mrf.mxu0
      %v959 = vadd.f32 0.0, %v958
      %v960 = vpop.f32.mrf.mxu0
      %961 = vmatprep.mubr.bf16.mxu0 %v522
      %962 = vmatmul.mubr.bf16.gmra.mxu0 %v521
      %v963 = vpop.f32.mrf.mxu0
      %v964 = vadd.f32 0.0, %v963
      %v965 = vpop.f32.mrf.mxu0
      %v966 = vpop.f32.mrf.mxu0
      %v967 = vadd.f32 0.0, %v966
      %v968 = vpop.f32.mrf.mxu0
      %969 = vmatprep.mubr.bf16.mxu0 %v526
      %970 = vmatmul.mubr.bf16.gmra.mxu0 %v525
      %v971 = vpop.f32.mrf.mxu0
      %v972 = vadd.f32 0.0, %v971
      %v973 = vpop.f32.mrf.mxu0
      %v974 = vpop.f32.mrf.mxu0
      %v975 = vadd.f32 0.0, %v974
      %v976 = vpop.f32.mrf.mxu0
      %977 = vmatprep.mubr.bf16.mxu0 %v530
      %978 = vmatmul.mubr.bf16.gmra.mxu0 %v529
      %v979 = vpop.f32.mrf.mxu0
      %v980 = vadd.f32 0.0, %v979
      %v981 = vpop.f32.mrf.mxu0
      %v982 = vpop.f32.mrf.mxu0
      %v983 = vadd.f32 0.0, %v982
      %v984 = vpop.f32.mrf.mxu0
      %985 = vmatprep.mubr.bf16.mxu0 %v534
      %986 = vmatmul.mubr.bf16.gmra.mxu0 %v533
      %v987 = vpop.f32.mrf.mxu0
      %v988 = vadd.f32 0.0, %v987
      %v989 = vpop.f32.mrf.mxu0
      %v990 = vpop.f32.mrf.mxu0
      %v991 = vadd.f32 0.0, %v990
      %v992 = vpop.f32.mrf.mxu0
      %993 = vmatprep.mubr.bf16.mxu0 %v538
      %994 = vmatmul.mubr.bf16.gmra.mxu0 %v537
      %v995 = vpop.f32.mrf.mxu0
      %v996 = vadd.f32 0.0, %v995
      %v997 = vpop.f32.mrf.mxu0
      %v998 = vpop.f32.mrf.mxu0
      %v999 = vadd.f32 0.0, %v998
      %v1000 = vpop.f32.mrf.mxu0
      %1001 = vmatprep.mubr.bf16.mxu0 %v542
      %1002 = vmatmul.mubr.bf16.gmra.mxu0 %v541
      %v1003 = vpop.f32.mrf.mxu0
      %v1004 = vadd.f32 0.0, %v1003
      %v1005 = vpop.f32.mrf.mxu0
      %v1006 = vpop.f32.mrf.mxu0
      %v1007 = vadd.f32 0.0, %v1006
      %v1008 = vpop.f32.mrf.mxu0
      %1009 = vmatprep.mubr.bf16.mxu0 %v546
      %1010 = vmatmul.mubr.bf16.gmra.mxu0 %v545
      %v1011 = vpop.f32.mrf.mxu0
      %v1012 = vadd.f32 0.0, %v1011
      %v1013 = vpop.f32.mrf.mxu0
      %v1014 = vpop.f32.mrf.mxu0
      %v1015 = vadd.f32 0.0, %v1014
      %v1016 = vpop.f32.mrf.mxu0
      %1017 = vmatprep.mubr.bf16.mxu0 %v550
      %1018 = vmatmul.mubr.bf16.gmra.mxu0 %v549
      %v1019 = vpop.f32.mrf.mxu0
      %v1020 = vadd.f32 0.0, %v1019
      %v1021 = vpop.f32.mrf.mxu0
      %v1022 = vpop.f32.mrf.mxu0
      %v1023 = vadd.f32 0.0, %v1022
      %v1024 = vpop.f32.mrf.mxu0
      %1025 = vmatprep.mubr.bf16.mxu0 %v554
      %1026 = vmatmul.mubr.bf16.gmra.mxu0 %v553
      %v1027 = vpop.f32.mrf.mxu0
      %v1028 = vadd.f32 0.0, %v1027
      %v1029 = vpop.f32.mrf.mxu0
      %v1030 = vpop.f32.mrf.mxu0
      %v1031 = vadd.f32 0.0, %v1030
      %v1032 = vpop.f32.mrf.mxu0
      %1033 = vmatprep.mubr.bf16.mxu0 %v558
      %1034 = vmatmul.mubr.bf16.gmra.mxu0 %v557
      %v1035 = vpop.f32.mrf.mxu0
      %v1036 = vadd.f32 0.0, %v1035
      %v1037 = vpop.f32.mrf.mxu0
      %v1038 = vpop.f32.mrf.mxu0
      %v1039 = vadd.f32 0.0, %v1038
      %v1040 = vpop.f32.mrf.mxu0
      %1041 = vmatprep.mubr.bf16.mxu0 %v562
      %1042 = vmatmul.mubr.bf16.gmra.mxu0 %v561
      %v1043 = vpop.f32.mrf.mxu0
      %v1044 = vadd.f32 0.0, %v1043
      %v1045 = vpop.f32.mrf.mxu0
      %v1046 = vpop.f32.mrf.mxu0
      %v1047 = vadd.f32 0.0, %v1046
      %v1048 = vpop.f32.mrf.mxu0
      %1049 = vmatprep.mubr.bf16.mxu0 %v566
      %1050 = vmatmul.mubr.bf16.gmra.mxu0 %v565
      %v1051 = vpop.f32.mrf.mxu0
      %v1052 = vadd.f32 0.0, %v1051
      %v1053 = vpop.f32.mrf.mxu0
      %v1054 = vpop.f32.mrf.mxu0
      %v1055 = vadd.f32 0.0, %v1054
      %v1056 = vpop.f32.mrf.mxu0
      %1057 = vmatprep.mubr.bf16.mxu0 %v570
      %1058 = vmatmul.mubr.bf16.gmra.mxu0 %v569
      %v1059 = vpop.f32.mrf.mxu0
      %v1060 = vadd.f32 0.0, %v1059
      %v1061 = vpop.f32.mrf.mxu0
      %v1062 = vpop.f32.mrf.mxu0
      %v1063 = vadd.f32 0.0, %v1062
      %v1064 = vpop.f32.mrf.mxu0
      %1065 = vmatprep.mubr.bf16.mxu0 %v574
      %1066 = vmatmul.mubr.bf16.gmra.mxu0 %v573
      %v1067 = vpop.f32.mrf.mxu0
      %v1068 = vadd.f32 0.0, %v1067
      %v1069 = vpop.f32.mrf.mxu0
      %v1070 = vpop.f32.mrf.mxu0
      %v1071 = vadd.f32 0.0, %v1070
      %v1072 = vpop.f32.mrf.mxu0
      %1073 = vmatprep.mubr.bf16.mxu0 %v578
      %1074 = vmatmul.mubr.bf16.gmra.mxu0 %v577
      %v1075 = vpop.f32.mrf.mxu0
      %v1076 = vadd.f32 0.0, %v1075
      %v1077 = vpop.f32.mrf.mxu0
      %v1078 = vpop.f32.mrf.mxu0
      %v1079 = vadd.f32 0.0, %v1078
      %v1080 = vpop.f32.mrf.mxu0
      %1081 = vmatprep.mubr.bf16.mxu0 %v582
      %1082 = vmatmul.mubr.bf16.gmra.mxu0 %v581
      %v1083 = vpop.f32.mrf.mxu0
      %v1084 = vadd.f32 0.0, %v1083
      %v1085 = vpop.f32.mrf.mxu0
      %v1086 = vpop.f32.mrf.mxu0
      %v1087 = vadd.f32 0.0, %v1086
      %v1088 = vpop.f32.mrf.mxu0
      %1089 = vmatprep.mubr.bf16.mxu0 %v586
      %1090 = vmatmul.mubr.bf16.gmra.mxu0 %v585
      %v1091 = vpop.f32.mrf.mxu0
      %v1092 = vadd.f32 0.0, %v1091
      %v1093 = vpop.f32.mrf.mxu0
      %v1094 = vpop.f32.mrf.mxu0
      %v1095 = vadd.f32 0.0, %v1094
      %v1096 = vpop.f32.mrf.mxu0
      %1097 = vmatprep.mubr.bf16.mxu0 %v590
      %1098 = vmatmul.mubr.bf16.gmra.mxu0 %v589
      %v1099 = vpop.f32.mrf.mxu0
      %v1100 = vadd.f32 0.0, %v1099
      %v1101 = vpop.f32.mrf.mxu0
      %v1102 = vpop.f32.mrf.mxu0
      %v1103 = vadd.f32 0.0, %v1102
      %v1104 = vpop.f32.mrf.mxu0
      %1105 = vmatprep.mubr.bf16.mxu0 %v594
      %1106 = vmatmul.mubr.bf16.gmra.mxu0 %v593
      %v1107 = vpop.f32.mrf.mxu0
      %v1108 = vadd.f32 0.0, %v1107
      %v1109 = vpop.f32.mrf.mxu0
      %v1110 = vpop.f32.mrf.mxu0
      %v1111 = vadd.f32 0.0, %v1110
      %v1112 = vpop.f32.mrf.mxu0
      %1113 = vmatprep.mubr.bf16.mxu0 %v598
      %1114 = vmatmul.mubr.bf16.gmra.mxu0 %v597
      %v1115 = vpop.f32.mrf.mxu0
      %v1116 = vadd.f32 0.0, %v1115
      %v1117 = vpop.f32.mrf.mxu0
      %v1118 = vpop.f32.mrf.mxu0
      %v1119 = vadd.f32 0.0, %v1118
      %v1120 = vpop.f32.mrf.mxu0
      %1121 = vmatprep.mubr.bf16.mxu0 %v602
      %1122 = vmatmul.mubr.bf16.gmra.mxu0 %v601
      %v1123 = vpop.f32.mrf.mxu0
      %v1124 = vadd.f32 0.0, %v1123
      %v1125 = vpop.f32.mrf.mxu0
      %v1126 = vpop.f32.mrf.mxu0
      %v1127 = vadd.f32 0.0, %v1126
      %v1128 = vpop.f32.mrf.mxu0
      %1129 = vmatprep.mubr.bf16.mxu0 %v606
      %1130 = vmatmul.mubr.bf16.gmra.mxu0 %v605
      %v1131 = vpop.f32.mrf.mxu0
      %v1132 = vadd.f32 0.0, %v1131
      %v1133 = vpop.f32.mrf.mxu0
      %v1134 = vpop.f32.mrf.mxu0
      %v1135 = vadd.f32 0.0, %v1134
      %v1136 = vpop.f32.mrf.mxu0
      %1137 = vmatprep.mubr.bf16.mxu0 %v610
      %1138 = vmatmul.mubr.bf16.gmra.mxu0 %v609
      %v1139 = vpop.f32.mrf.mxu0
      %v1140 = vadd.f32 0.0, %v1139
      %v1141 = vpop.f32.mrf.mxu0
      %v1142 = vpop.f32.mrf.mxu0
      %v1143 = vadd.f32 0.0, %v1142
      %v1144 = vpop.f32.mrf.mxu0
      %1145 = vmatprep.mubr.bf16.mxu0 %v614
      %1146 = vmatmul.mubr.bf16.gmra.mxu0 %v613
      %v1147 = vpop.f32.mrf.mxu0
      %v1148 = vadd.f32 0.0, %v1147
      %v1149 = vpop.f32.mrf.mxu0
      %v1150 = vpop.f32.mrf.mxu0
      %v1151 = vadd.f32 0.0, %v1150
      %v1152 = vpop.f32.mrf.mxu0
      %1153 = vmatprep.mubr.bf16.mxu0 %v618
      %1154 = vmatmul.mubr.bf16.gmra.mxu0 %v617
      %v1155 = vpop.f32.mrf.mxu0
      %v1156 = vadd.f32 0.0, %v1155
      %v1157 = vpop.f32.mrf.mxu0
      %v1158 = vpop.f32.mrf.mxu0
      %v1159 = vadd.f32 0.0, %v1158
      %v1160 = vpop.f32.mrf.mxu0
      %1161 = vmatprep.mubr.bf16.mxu0 %v622
      %1162 = vmatmul.mubr.bf16.gmra.mxu0 %v621
      %v1163 = vpop.f32.mrf.mxu0
      %v1164 = vadd.f32 0.0, %v1163
      %v1165 = vpop.f32.mrf.mxu0
      %v1166 = vpop.f32.mrf.mxu0
      %v1167 = vadd.f32 0.0, %v1166
      %v1168 = vpop.f32.mrf.mxu0
      %1169 = vdwg.mxu0
      %1170 = vmatprep.subr.bf16.mxu0 0
      %1171 = vmatpush1.bf16.msra.mxu0 %v840
      %1172 = vmatprep.subr.bf16.mxu0 0
      %1173 = vmatpush1.bf16.msra.mxu0 %v839
      %1174 = vmatprep.subr.bf16.mxu0 0
      %1175 = vmatpush1.bf16.msra.mxu0 %v838
      %1176 = vmatprep.subr.bf16.mxu0 0
      %1177 = vmatpush1.bf16.msra.mxu0 %v837
      %1178 = vmatprep.subr.bf16.mxu0 0
      %1179 = vmatpush1.bf16.msra.mxu0 %v836
      %1180 = vmatprep.subr.bf16.mxu0 0
      %1181 = vmatpush1.bf16.msra.mxu0 %v835
      %1182 = vmatprep.subr.bf16.mxu0 0
      %1183 = vmatpush1.bf16.msra.mxu0 %v834
      %1184 = vmatprep.subr.bf16.mxu0 0
      %1185 = vmatpush1.bf16.msra.mxu0 %v833
      %1186 = vmatprep.subr.bf16.mxu0 0
      %1187 = vmatpush2.bf16.msra.mxu0 %v848
      %1188 = vmatprep.subr.bf16.mxu0 0
      %1189 = vmatpush2.bf16.msra.mxu0 %v847
      %1190 = vmatprep.subr.bf16.mxu0 0
      %1191 = vmatpush2.bf16.msra.mxu0 %v846
      %1192 = vmatprep.subr.bf16.mxu0 0
      %1193 = vmatpush2.bf16.msra.mxu0 %v845
      %1194 = vmatprep.subr.bf16.mxu0 0
      %1195 = vmatpush2.bf16.msra.mxu0 %v844
      %1196 = vmatprep.subr.bf16.mxu0 0
      %1197 = vmatpush2.bf16.msra.mxu0 %v843
      %1198 = vmatprep.subr.bf16.mxu0 0
      %1199 = vmatpush2.bf16.msra.mxu0 %v842
      %1200 = vmatprep.subr.bf16.mxu0 0
      %1201 = vmatpush2.bf16.msra.mxu0 %v841
      %1202 = vmatprep.mubr.bf16.mxu0 %v500
      %1203 = vmatmul.mubr.bf16.gmra.mxu0 %v499
      %v1204 = vpop.f32.mrf.mxu0
      %v1205 = vadd.f32 %v916, %v1204
      %v1206 = vpop.f32.mrf.mxu0
      %v1207 = vpop.f32.mrf.mxu0
      %v1208 = vadd.f32 %v919, %v1207
      %v1209 = vpop.f32.mrf.mxu0
      %1210 = vmatprep.mubr.bf16.mxu0 %v504
      %1211 = vmatmul.mubr.bf16.gmra.mxu0 %v503
      %v1212 = vpop.f32.mrf.mxu0
      %v1213 = vadd.f32 %v924, %v1212
      %v1214 = vpop.f32.mrf.mxu0
      %v1215 = vpop.f32.mrf.mxu0
      %v1216 = vadd.f32 %v927, %v1215
      %v1217 = vpop.f32.mrf.mxu0
      %1218 = vmatprep.mubr.bf16.mxu0 %v508
      %1219 = vmatmul.mubr.bf16.gmra.mxu0 %v507
      %v1220 = vpop.f32.mrf.mxu0
      %v1221 = vadd.f32 %v932, %v1220
      %v1222 = vpop.f32.mrf.mxu0
      %v1223 = vpop.f32.mrf.mxu0
      %v1224 = vadd.f32 %v935, %v1223
      %v1225 = vpop.f32.mrf.mxu0
      %1226 = vmatprep.mubr.bf16.mxu0 %v512
      %1227 = vmatmul.mubr.bf16.gmra.mxu0 %v511
      %v1228 = vpop.f32.mrf.mxu0
      %v1229 = vadd.f32 %v940, %v1228
      %v1230 = vpop.f32.mrf.mxu0
      %v1231 = vpop.f32.mrf.mxu0
      %v1232 = vadd.f32 %v943, %v1231
      %v1233 = vpop.f32.mrf.mxu0
      %1234 = vmatprep.mubr.bf16.mxu0 %v516
      %1235 = vmatmul.mubr.bf16.gmra.mxu0 %v515
      %v1236 = vpop.f32.mrf.mxu0
      %v1237 = vadd.f32 %v948, %v1236
      %v1238 = vpop.f32.mrf.mxu0
      %v1239 = vpop.f32.mrf.mxu0
      %v1240 = vadd.f32 %v951, %v1239
      %v1241 = vpop.f32.mrf.mxu0
      %1242 = vmatprep.mubr.bf16.mxu0 %v520
      %1243 = vmatmul.mubr.bf16.gmra.mxu0 %v519
      %v1244 = vpop.f32.mrf.mxu0
      %v1245 = vadd.f32 %v956, %v1244
      %v1246 = vpop.f32.mrf.mxu0
      %v1247 = vpop.f32.mrf.mxu0
      %v1248 = vadd.f32 %v959, %v1247
      %v1249 = vpop.f32.mrf.mxu0
      %1250 = vmatprep.mubr.bf16.mxu0 %v524
      %1251 = vmatmul.mubr.bf16.gmra.mxu0 %v523
      %v1252 = vpop.f32.mrf.mxu0
      %v1253 = vadd.f32 %v964, %v1252
      %v1254 = vpop.f32.mrf.mxu0
      %v1255 = vpop.f32.mrf.mxu0
      %v1256 = vadd.f32 %v967, %v1255
      %v1257 = vpop.f32.mrf.mxu0
      %1258 = vmatprep.mubr.bf16.mxu0 %v528
      %1259 = vmatmul.mubr.bf16.gmra.mxu0 %v527
      %v1260 = vpop.f32.mrf.mxu0
      %v1261 = vadd.f32 %v972, %v1260
      %v1262 = vpop.f32.mrf.mxu0
      %v1263 = vpop.f32.mrf.mxu0
      %v1264 = vadd.f32 %v975, %v1263
      %v1265 = vpop.f32.mrf.mxu0
      %1266 = vmatprep.mubr.bf16.mxu0 %v532
      %1267 = vmatmul.mubr.bf16.gmra.mxu0 %v531
      %v1268 = vpop.f32.mrf.mxu0
      %v1269 = vadd.f32 %v980, %v1268
      %v1270 = vpop.f32.mrf.mxu0
      %v1271 = vpop.f32.mrf.mxu0
      %v1272 = vadd.f32 %v983, %v1271
      %v1273 = vpop.f32.mrf.mxu0
      %1274 = vmatprep.mubr.bf16.mxu0 %v536
      %1275 = vmatmul.mubr.bf16.gmra.mxu0 %v535
      %v1276 = vpop.f32.mrf.mxu0
      %v1277 = vadd.f32 %v988, %v1276
      %v1278 = vpop.f32.mrf.mxu0
      %v1279 = vpop.f32.mrf.mxu0
      %v1280 = vadd.f32 %v991, %v1279
      %v1281 = vpop.f32.mrf.mxu0
      %1282 = vmatprep.mubr.bf16.mxu0 %v540
      %1283 = vmatmul.mubr.bf16.gmra.mxu0 %v539
      %v1284 = vpop.f32.mrf.mxu0
      %v1285 = vadd.f32 %v996, %v1284
      %v1286 = vpop.f32.mrf.mxu0
      %v1287 = vpop.f32.mrf.mxu0
      %v1288 = vadd.f32 %v999, %v1287
      %v1289 = vpop.f32.mrf.mxu0
      %1290 = vmatprep.mubr.bf16.mxu0 %v544
      %1291 = vmatmul.mubr.bf16.gmra.mxu0 %v543
      %v1292 = vpop.f32.mrf.mxu0
      %v1293 = vadd.f32 %v1004, %v1292
      %v1294 = vpop.f32.mrf.mxu0
      %v1295 = vpop.f32.mrf.mxu0
      %v1296 = vadd.f32 %v1007, %v1295
      %v1297 = vpop.f32.mrf.mxu0
      %1298 = vmatprep.mubr.bf16.mxu0 %v548
      %1299 = vmatmul.mubr.bf16.gmra.mxu0 %v547
      %v1300 = vpop.f32.mrf.mxu0
      %v1301 = vadd.f32 %v1012, %v1300
      %v1302 = vpop.f32.mrf.mxu0
      %v1303 = vpop.f32.mrf.mxu0
      %v1304 = vadd.f32 %v1015, %v1303
      %v1305 = vpop.f32.mrf.mxu0
      %1306 = vmatprep.mubr.bf16.mxu0 %v552
      %1307 = vmatmul.mubr.bf16.gmra.mxu0 %v551
      %v1308 = vpop.f32.mrf.mxu0
      %v1309 = vadd.f32 %v1020, %v1308
      %v1310 = vpop.f32.mrf.mxu0
      %v1311 = vpop.f32.mrf.mxu0
      %v1312 = vadd.f32 %v1023, %v1311
      %v1313 = vpop.f32.mrf.mxu0
      %1314 = vmatprep.mubr.bf16.mxu0 %v556
      %1315 = vmatmul.mubr.bf16.gmra.mxu0 %v555
      %v1316 = vpop.f32.mrf.mxu0
      %v1317 = vadd.f32 %v1028, %v1316
      %v1318 = vpop.f32.mrf.mxu0
      %v1319 = vpop.f32.mrf.mxu0
      %v1320 = vadd.f32 %v1031, %v1319
      %v1321 = vpop.f32.mrf.mxu0
      %1322 = vmatprep.mubr.bf16.mxu0 %v560
      %1323 = vmatmul.mubr.bf16.gmra.mxu0 %v559
      %v1324 = vpop.f32.mrf.mxu0
      %v1325 = vadd.f32 %v1036, %v1324
      %v1326 = vpop.f32.mrf.mxu0
      %v1327 = vpop.f32.mrf.mxu0
      %v1328 = vadd.f32 %v1039, %v1327
      %v1329 = vpop.f32.mrf.mxu0
      %1330 = vmatprep.mubr.bf16.mxu0 %v564
      %1331 = vmatmul.mubr.bf16.gmra.mxu0 %v563
      %v1332 = vpop.f32.mrf.mxu0
      %v1333 = vadd.f32 %v1044, %v1332
      %v1334 = vpop.f32.mrf.mxu0
      %v1335 = vpop.f32.mrf.mxu0
      %v1336 = vadd.f32 %v1047, %v1335
      %v1337 = vpop.f32.mrf.mxu0
      %1338 = vmatprep.mubr.bf16.mxu0 %v568
      %1339 = vmatmul.mubr.bf16.gmra.mxu0 %v567
      %v1340 = vpop.f32.mrf.mxu0
      %v1341 = vadd.f32 %v1052, %v1340
      %v1342 = vpop.f32.mrf.mxu0
      %v1343 = vpop.f32.mrf.mxu0
      %v1344 = vadd.f32 %v1055, %v1343
      %v1345 = vpop.f32.mrf.mxu0
      %1346 = vmatprep.mubr.bf16.mxu0 %v572
      %1347 = vmatmul.mubr.bf16.gmra.mxu0 %v571
      %v1348 = vpop.f32.mrf.mxu0
      %v1349 = vadd.f32 %v1060, %v1348
      %v1350 = vpop.f32.mrf.mxu0
      %v1351 = vpop.f32.mrf.mxu0
      %v1352 = vadd.f32 %v1063, %v1351
      %v1353 = vpop.f32.mrf.mxu0
      %1354 = vmatprep.mubr.bf16.mxu0 %v576
      %1355 = vmatmul.mubr.bf16.gmra.mxu0 %v575
      %v1356 = vpop.f32.mrf.mxu0
      %v1357 = vadd.f32 %v1068, %v1356
      %v1358 = vpop.f32.mrf.mxu0
      %v1359 = vpop.f32.mrf.mxu0
      %v1360 = vadd.f32 %v1071, %v1359
      %v1361 = vpop.f32.mrf.mxu0
      %1362 = vmatprep.mubr.bf16.mxu0 %v580
      %1363 = vmatmul.mubr.bf16.gmra.mxu0 %v579
      %v1364 = vpop.f32.mrf.mxu0
      %v1365 = vadd.f32 %v1076, %v1364
      %v1366 = vpop.f32.mrf.mxu0
      %v1367 = vpop.f32.mrf.mxu0
      %v1368 = vadd.f32 %v1079, %v1367
      %v1369 = vpop.f32.mrf.mxu0
      %1370 = vmatprep.mubr.bf16.mxu0 %v584
      %1371 = vmatmul.mubr.bf16.gmra.mxu0 %v583
      %v1372 = vpop.f32.mrf.mxu0
      %v1373 = vadd.f32 %v1084, %v1372
      %v1374 = vpop.f32.mrf.mxu0
      %v1375 = vpop.f32.mrf.mxu0
      %v1376 = vadd.f32 %v1087, %v1375
      %v1377 = vpop.f32.mrf.mxu0
      %1378 = vmatprep.mubr.bf16.mxu0 %v588
      %1379 = vmatmul.mubr.bf16.gmra.mxu0 %v587
      %v1380 = vpop.f32.mrf.mxu0
      %v1381 = vadd.f32 %v1092, %v1380
      %v1382 = vpop.f32.mrf.mxu0
      %v1383 = vpop.f32.mrf.mxu0
      %v1384 = vadd.f32 %v1095, %v1383
      %v1385 = vpop.f32.mrf.mxu0
      %1386 = vmatprep.mubr.bf16.mxu0 %v592
      %1387 = vmatmul.mubr.bf16.gmra.mxu0 %v591
      %v1388 = vpop.f32.mrf.mxu0
      %v1389 = vadd.f32 %v1100, %v1388
      %v1390 = vpop.f32.mrf.mxu0
      %v1391 = vpop.f32.mrf.mxu0
      %v1392 = vadd.f32 %v1103, %v1391
      %v1393 = vpop.f32.mrf.mxu0
      %1394 = vmatprep.mubr.bf16.mxu0 %v596
      %1395 = vmatmul.mubr.bf16.gmra.mxu0 %v595
      %v1396 = vpop.f32.mrf.mxu0
      %v1397 = vadd.f32 %v1108, %v1396
      %v1398 = vpop.f32.mrf.mxu0
      %v1399 = vpop.f32.mrf.mxu0
      %v1400 = vadd.f32 %v1111, %v1399
      %v1401 = vpop.f32.mrf.mxu0
      %1402 = vmatprep.mubr.bf16.mxu0 %v600
      %1403 = vmatmul.mubr.bf16.gmra.mxu0 %v599
      %v1404 = vpop.f32.mrf.mxu0
      %v1405 = vadd.f32 %v1116, %v1404
      %v1406 = vpop.f32.mrf.mxu0
      %v1407 = vpop.f32.mrf.mxu0
      %v1408 = vadd.f32 %v1119, %v1407
      %v1409 = vpop.f32.mrf.mxu0
      %1410 = vmatprep.mubr.bf16.mxu0 %v604
      %1411 = vmatmul.mubr.bf16.gmra.mxu0 %v603
      %v1412 = vpop.f32.mrf.mxu0
      %v1413 = vadd.f32 %v1124, %v1412
      %v1414 = vpop.f32.mrf.mxu0
      %v1415 = vpop.f32.mrf.mxu0
      %v1416 = vadd.f32 %v1127, %v1415
      %v1417 = vpop.f32.mrf.mxu0
      %1418 = vmatprep.mubr.bf16.mxu0 %v608
      %1419 = vmatmul.mubr.bf16.gmra.mxu0 %v607
      %v1420 = vpop.f32.mrf.mxu0
      %v1421 = vadd.f32 %v1132, %v1420
      %v1422 = vpop.f32.mrf.mxu0
      %v1423 = vpop.f32.mrf.mxu0
      %v1424 = vadd.f32 %v1135, %v1423
      %v1425 = vpop.f32.mrf.mxu0
      %1426 = vmatprep.mubr.bf16.mxu0 %v612
      %1427 = vmatmul.mubr.bf16.gmra.mxu0 %v611
      %v1428 = vpop.f32.mrf.mxu0
      %v1429 = vadd.f32 %v1140, %v1428
      %v1430 = vpop.f32.mrf.mxu0
      %v1431 = vpop.f32.mrf.mxu0
      %v1432 = vadd.f32 %v1143, %v1431
      %v1433 = vpop.f32.mrf.mxu0
      %1434 = vmatprep.mubr.bf16.mxu0 %v616
      %1435 = vmatmul.mubr.bf16.gmra.mxu0 %v615
      %v1436 = vpop.f32.mrf.mxu0
      %v1437 = vadd.f32 %v1148, %v1436
      %v1438 = vpop.f32.mrf.mxu0
      %v1439 = vpop.f32.mrf.mxu0
      %v1440 = vadd.f32 %v1151, %v1439
      %v1441 = vpop.f32.mrf.mxu0
      %1442 = vmatprep.mubr.bf16.mxu0 %v620
      %1443 = vmatmul.mubr.bf16.gmra.mxu0 %v619
      %v1444 = vpop.f32.mrf.mxu0
      %v1445 = vadd.f32 %v1156, %v1444
      %v1446 = vpop.f32.mrf.mxu0
      %v1447 = vpop.f32.mrf.mxu0
      %v1448 = vadd.f32 %v1159, %v1447
      %v1449 = vpop.f32.mrf.mxu0
      %1450 = vmatprep.mubr.bf16.mxu0 %v624
      %1451 = vmatmul.mubr.bf16.gmra.mxu0 %v623
      %v1452 = vpop.f32.mrf.mxu0
      %v1453 = vadd.f32 %v1164, %v1452
      %v1454 = vpop.f32.mrf.mxu0
      %v1455 = vpop.f32.mrf.mxu0
      %v1456 = vadd.f32 %v1167, %v1455
      %v1457 = vpop.f32.mrf.mxu0
      %1458 = vdwg.mxu0
      %v1459 = vpack.c.bf16 %v1208, %v1205
      %v1460 = vpack.c.bf16 %v1216, %v1213
      %v1461 = vpack.c.bf16 %v1224, %v1221
      %v1462 = vpack.c.bf16 %v1232, %v1229
      %v1463 = vpack.c.bf16 %v1240, %v1237
      %v1464 = vpack.c.bf16 %v1248, %v1245
      %v1465 = vpack.c.bf16 %v1256, %v1253
      %v1466 = vpack.c.bf16 %v1264, %v1261
      %v1467 = vpack.c.bf16 %v1272, %v1269
      %v1468 = vpack.c.bf16 %v1280, %v1277
      %v1469 = vpack.c.bf16 %v1288, %v1285
      %v1470 = vpack.c.bf16 %v1296, %v1293
      %v1471 = vpack.c.bf16 %v1304, %v1301
      %v1472 = vpack.c.bf16 %v1312, %v1309
      %v1473 = vpack.c.bf16 %v1320, %v1317
      %v1474 = vpack.c.bf16 %v1328, %v1325
      %v1475 = vpack.c.bf16 %v1336, %v1333
      %v1476 = vpack.c.bf16 %v1344, %v1341
      %v1477 = vpack.c.bf16 %v1352, %v1349
      %v1478 = vpack.c.bf16 %v1360, %v1357
      %v1479 = vpack.c.bf16 %v1368, %v1365
      %v1480 = vpack.c.bf16 %v1376, %v1373
      %v1481 = vpack.c.bf16 %v1384, %v1381
      %v1482 = vpack.c.bf16 %v1392, %v1389
      %v1483 = vpack.c.bf16 %v1400, %v1397
      %v1484 = vpack.c.bf16 %v1408, %v1405
      %v1485 = vpack.c.bf16 %v1416, %v1413
      %v1486 = vpack.c.bf16 %v1424, %v1421
      %v1487 = vpack.c.bf16 %v1432, %v1429
      %v1488 = vpack.c.bf16 %v1440, %v1437
      %v1489 = vpack.c.bf16 %v1448, %v1445
      %v1490 = vpack.c.bf16 %v1456, %v1453
      %v1491 = vld [vmem:[%s283] sm:$0xf]
      %v1492 = vld [vmem:[%s283 + $0x4] sm:$0xf]
      %v1493 = vld [vmem:[%s283 + $0x8] sm:$0xf]
      %v1494 = vld [vmem:[%s283 + $0xc] sm:$0xf]
      %v1495 = vld [vmem:[%s283 + $0x10] sm:$0xf]
      %v1496 = vld [vmem:[%s283 + $0x14] sm:$0xf]
      %v1497 = vld [vmem:[%s283 + $0x18] sm:$0xf]
      %v1498 = vld [vmem:[%s283 + $0x1c] sm:$0xf]
      %v1499 = vld [vmem:[%s283 + $0x20] sm:$0xf]
      %v1500 = vld [vmem:[%s283 + $0x24] sm:$0xf]
      %v1501 = vld [vmem:[%s283 + $0x28] sm:$0xf]
      %v1502 = vld [vmem:[%s283 + $0x2c] sm:$0xf]
      %v1503 = vld [vmem:[%s283 + $0x30] sm:$0xf]
      %v1504 = vld [vmem:[%s283 + $0x34] sm:$0xf]
      %v1505 = vld [vmem:[%s283 + $0x38] sm:$0xf]
      %v1506 = vld [vmem:[%s283 + $0x3c] sm:$0xf]
      %v1507 = vld [vmem:[%s286] sm:$0x1]
      %v1509 = vlaneseq
      %v1510 = vshrl.u32 %v1509, 7
      %v1511 = vsub.s32 0, %v1510
      %v1512 = vrot.slane %v1507, %v1511
      %v1530 = vunpack.c.l.b16 %v1491
      %v1531 = vunpack.c.l.b16 %v1492
      %v1532 = vunpack.c.l.b16 %v1493
      %v1533 = vunpack.c.l.b16 %v1494
      %v1534 = vunpack.c.l.b16 %v1495
      %v1535 = vunpack.c.l.b16 %v1496
      %v1536 = vunpack.c.l.b16 %v1497
      %v1537 = vunpack.c.l.b16 %v1498
      %v1538 = vunpack.c.l.b16 %v1499
      %v1539 = vunpack.c.l.b16 %v1500
      %v1540 = vunpack.c.l.b16 %v1501
      %v1541 = vunpack.c.l.b16 %v1502
      %v1542 = vunpack.c.l.b16 %v1503
      %v1543 = vunpack.c.l.b16 %v1504
      %v1544 = vunpack.c.l.b16 %v1505
      %v1545 = vunpack.c.l.b16 %v1506
      %v1546 = vpack.c.b16 %v1531, %v1530
      %v1547 = vpack.c.b16 %v1533, %v1532
      %v1548 = vpack.c.b16 %v1535, %v1534
      %v1549 = vpack.c.b16 %v1537, %v1536
      %v1550 = vpack.c.b16 %v1539, %v1538
      %v1551 = vpack.c.b16 %v1541, %v1540
      %v1552 = vpack.c.b16 %v1543, %v1542
      %v1553 = vpack.c.b16 %v1545, %v1544
      %1562 = vmatprep.subr.bf16.mxu0 0
      %1563 = vmatpush1.bf16.msra.mxu0 %v1553
      %1564 = vmatprep.subr.bf16.mxu0 0
      %1565 = vmatpush1.bf16.msra.mxu0 %v1552
      %1566 = vmatprep.subr.bf16.mxu0 0
      %1567 = vmatpush1.bf16.msra.mxu0 %v1551
      %1568 = vmatprep.subr.bf16.mxu0 0
      %1569 = vmatpush1.bf16.msra.mxu0 %v1550
      %1570 = vmatprep.subr.bf16.mxu0 0
      %1571 = vmatpush1.bf16.msra.mxu0 %v1549
      %1572 = vmatprep.subr.bf16.mxu0 0
      %1573 = vmatpush1.bf16.msra.mxu0 %v1548
      %1574 = vmatprep.subr.bf16.mxu0 0
      %1575 = vmatpush1.bf16.msra.mxu0 %v1547
      %1576 = vmatprep.subr.bf16.mxu0 0
      %1577 = vmatpush1.bf16.msra.mxu0 %v1546
      %1578 = vmatprep.subr.bf16.mxu0 0
      %1579 = vmatpush2.bf16.msra.mxu0 0
      %1580 = vmatprep.subr.bf16.mxu0 0
      %1581 = vmatpush2.bf16.msra.mxu0 0
      %1582 = vmatprep.subr.bf16.mxu0 0
      %1583 = vmatpush2.bf16.msra.mxu0 0
      %1584 = vmatprep.subr.bf16.mxu0 0
      %1585 = vmatpush2.bf16.msra.mxu0 0
      %1586 = vmatprep.subr.bf16.mxu0 0
      %1587 = vmatpush2.bf16.msra.mxu0 0
      %1588 = vmatprep.subr.bf16.mxu0 0
      %1589 = vmatpush2.bf16.msra.mxu0 0
      %1590 = vmatprep.subr.bf16.mxu0 0
      %1591 = vmatpush2.bf16.msra.mxu0 0
      %1592 = vmatprep.subr.bf16.mxu0 0
      %1593 = vmatpush2.bf16.msra.mxu0 0
      %1594 = vmatprep.mubr.bf16.mxu0 0
      %1595 = vmatmul.mubr.bf16.gmra.mxu0 %v1459
      %v1596 = vpop.f32.mrf.mxu0
      %v1597 = vadd.f32 %v1512, %v1596
      %v1598 = vpop.f32.mrf.mxu0
      %v1599 = vpop.f32.mrf.mxu0
      %v1600 = vadd.f32 %v1512, %v1599
      %v1601 = vpop.f32.mrf.mxu0
      %1602 = vmatprep.mubr.bf16.mxu0 0
      %1603 = vmatmul.mubr.bf16.gmra.mxu0 %v1460
      %v1604 = vpop.f32.mrf.mxu0
      %v1605 = vadd.f32 %v1512, %v1604
      %v1606 = vpop.f32.mrf.mxu0
      %v1607 = vpop.f32.mrf.mxu0
      %v1608 = vadd.f32 %v1512, %v1607
      %v1609 = vpop.f32.mrf.mxu0
      %1610 = vmatprep.mubr.bf16.mxu0 0
      %1611 = vmatmul.mubr.bf16.gmra.mxu0 %v1461
      %v1612 = vpop.f32.mrf.mxu0
      %v1613 = vadd.f32 %v1512, %v1612
      %v1614 = vpop.f32.mrf.mxu0
      %v1615 = vpop.f32.mrf.mxu0
      %v1616 = vadd.f32 %v1512, %v1615
      %v1617 = vpop.f32.mrf.mxu0
      %1618 = vmatprep.mubr.bf16.mxu0 0
      %1619 = vmatmul.mubr.bf16.gmra.mxu0 %v1462
      %v1620 = vpop.f32.mrf.mxu0
      %v1621 = vadd.f32 %v1512, %v1620
      %v1622 = vpop.f32.mrf.mxu0
      %v1623 = vpop.f32.mrf.mxu0
      %v1624 = vadd.f32 %v1512, %v1623
      %v1625 = vpop.f32.mrf.mxu0
      %1626 = vmatprep.mubr.bf16.mxu0 0
      %1627 = vmatmul.mubr.bf16.gmra.mxu0 %v1463
      %v1628 = vpop.f32.mrf.mxu0
      %v1629 = vadd.f32 %v1512, %v1628
      %v1630 = vpop.f32.mrf.mxu0
      %v1631 = vpop.f32.mrf.mxu0
      %v1632 = vadd.f32 %v1512, %v1631
      %v1633 = vpop.f32.mrf.mxu0
      %1634 = vmatprep.mubr.bf16.mxu0 0
      %1635 = vmatmul.mubr.bf16.gmra.mxu0 %v1464
      %v1636 = vpop.f32.mrf.mxu0
      %v1637 = vadd.f32 %v1512, %v1636
      %v1638 = vpop.f32.mrf.mxu0
      %v1639 = vpop.f32.mrf.mxu0
      %v1640 = vadd.f32 %v1512, %v1639
      %v1641 = vpop.f32.mrf.mxu0
      %1642 = vmatprep.mubr.bf16.mxu0 0
      %1643 = vmatmul.mubr.bf16.gmra.mxu0 %v1465
      %v1644 = vpop.f32.mrf.mxu0
      %v1645 = vadd.f32 %v1512, %v1644
      %v1646 = vpop.f32.mrf.mxu0
      %v1647 = vpop.f32.mrf.mxu0
      %v1648 = vadd.f32 %v1512, %v1647
      %v1649 = vpop.f32.mrf.mxu0
      %1650 = vmatprep.mubr.bf16.mxu0 0
      %1651 = vmatmul.mubr.bf16.gmra.mxu0 %v1466
      %v1652 = vpop.f32.mrf.mxu0
      %v1653 = vadd.f32 %v1512, %v1652
      %v1654 = vpop.f32.mrf.mxu0
      %v1655 = vpop.f32.mrf.mxu0
      %v1656 = vadd.f32 %v1512, %v1655
      %v1657 = vpop.f32.mrf.mxu0
      %1658 = vmatprep.mubr.bf16.mxu0 0
      %1659 = vmatmul.mubr.bf16.gmra.mxu0 %v1467
      %v1660 = vpop.f32.mrf.mxu0
      %v1661 = vadd.f32 %v1512, %v1660
      %v1662 = vpop.f32.mrf.mxu0
      %v1663 = vpop.f32.mrf.mxu0
      %v1664 = vadd.f32 %v1512, %v1663
      %v1665 = vpop.f32.mrf.mxu0
      %1666 = vmatprep.mubr.bf16.mxu0 0
      %1667 = vmatmul.mubr.bf16.gmra.mxu0 %v1468
      %v1668 = vpop.f32.mrf.mxu0
      %v1669 = vadd.f32 %v1512, %v1668
      %v1670 = vpop.f32.mrf.mxu0
      %v1671 = vpop.f32.mrf.mxu0
      %v1672 = vadd.f32 %v1512, %v1671
      %v1673 = vpop.f32.mrf.mxu0
      %1674 = vmatprep.mubr.bf16.mxu0 0
      %1675 = vmatmul.mubr.bf16.gmra.mxu0 %v1469
      %v1676 = vpop.f32.mrf.mxu0
      %v1677 = vadd.f32 %v1512, %v1676
      %v1678 = vpop.f32.mrf.mxu0
      %v1679 = vpop.f32.mrf.mxu0
      %v1680 = vadd.f32 %v1512, %v1679
      %v1681 = vpop.f32.mrf.mxu0
      %1682 = vmatprep.mubr.bf16.mxu0 0
      %1683 = vmatmul.mubr.bf16.gmra.mxu0 %v1470
      %v1684 = vpop.f32.mrf.mxu0
      %v1685 = vadd.f32 %v1512, %v1684
      %v1686 = vpop.f32.mrf.mxu0
      %v1687 = vpop.f32.mrf.mxu0
      %v1688 = vadd.f32 %v1512, %v1687
      %v1689 = vpop.f32.mrf.mxu0
      %1690 = vmatprep.mubr.bf16.mxu0 0
      %1691 = vmatmul.mubr.bf16.gmra.mxu0 %v1471
      %v1692 = vpop.f32.mrf.mxu0
      %v1693 = vadd.f32 %v1512, %v1692
      %v1694 = vpop.f32.mrf.mxu0
      %v1695 = vpop.f32.mrf.mxu0
      %v1696 = vadd.f32 %v1512, %v1695
      %v1697 = vpop.f32.mrf.mxu0
      %1698 = vmatprep.mubr.bf16.mxu0 0
      %1699 = vmatmul.mubr.bf16.gmra.mxu0 %v1472
      %v1700 = vpop.f32.mrf.mxu0
      %v1701 = vadd.f32 %v1512, %v1700
      %v1702 = vpop.f32.mrf.mxu0
      %v1703 = vpop.f32.mrf.mxu0
      %v1704 = vadd.f32 %v1512, %v1703
      %v1705 = vpop.f32.mrf.mxu0
      %1706 = vmatprep.mubr.bf16.mxu0 0
      %1707 = vmatmul.mubr.bf16.gmra.mxu0 %v1473
      %v1708 = vpop.f32.mrf.mxu0
      %v1709 = vadd.f32 %v1512, %v1708
      %v1710 = vpop.f32.mrf.mxu0
      %v1711 = vpop.f32.mrf.mxu0
      %v1712 = vadd.f32 %v1512, %v1711
      %v1713 = vpop.f32.mrf.mxu0
      %1714 = vmatprep.mubr.bf16.mxu0 0
      %1715 = vmatmul.mubr.bf16.gmra.mxu0 %v1474
      %v1716 = vpop.f32.mrf.mxu0
      %v1717 = vadd.f32 %v1512, %v1716
      %v1718 = vpop.f32.mrf.mxu0
      %v1719 = vpop.f32.mrf.mxu0
      %v1720 = vadd.f32 %v1512, %v1719
      %v1721 = vpop.f32.mrf.mxu0
      %1722 = vmatprep.mubr.bf16.mxu0 0
      %1723 = vmatmul.mubr.bf16.gmra.mxu0 %v1475
      %v1724 = vpop.f32.mrf.mxu0
      %v1725 = vadd.f32 %v1512, %v1724
      %v1726 = vpop.f32.mrf.mxu0
      %v1727 = vpop.f32.mrf.mxu0
      %v1728 = vadd.f32 %v1512, %v1727
      %v1729 = vpop.f32.mrf.mxu0
      %1730 = vmatprep.mubr.bf16.mxu0 0
      %1731 = vmatmul.mubr.bf16.gmra.mxu0 %v1476
      %v1732 = vpop.f32.mrf.mxu0
      %v1733 = vadd.f32 %v1512, %v1732
      %v1734 = vpop.f32.mrf.mxu0
      %v1735 = vpop.f32.mrf.mxu0
      %v1736 = vadd.f32 %v1512, %v1735
      %v1737 = vpop.f32.mrf.mxu0
      %1738 = vmatprep.mubr.bf16.mxu0 0
      %1739 = vmatmul.mubr.bf16.gmra.mxu0 %v1477
      %v1740 = vpop.f32.mrf.mxu0
      %v1741 = vadd.f32 %v1512, %v1740
      %v1742 = vpop.f32.mrf.mxu0
      %v1743 = vpop.f32.mrf.mxu0
      %v1744 = vadd.f32 %v1512, %v1743
      %v1745 = vpop.f32.mrf.mxu0
      %1746 = vmatprep.mubr.bf16.mxu0 0
      %1747 = vmatmul.mubr.bf16.gmra.mxu0 %v1478
      %v1748 = vpop.f32.mrf.mxu0
      %v1749 = vadd.f32 %v1512, %v1748
      %v1750 = vpop.f32.mrf.mxu0
      %v1751 = vpop.f32.mrf.mxu0
      %v1752 = vadd.f32 %v1512, %v1751
      %v1753 = vpop.f32.mrf.mxu0
      %1754 = vmatprep.mubr.bf16.mxu0 0
      %1755 = vmatmul.mubr.bf16.gmra.mxu0 %v1479
      %v1756 = vpop.f32.mrf.mxu0
      %v1757 = vadd.f32 %v1512, %v1756
      %v1758 = vpop.f32.mrf.mxu0
      %v1759 = vpop.f32.mrf.mxu0
      %v1760 = vadd.f32 %v1512, %v1759
      %v1761 = vpop.f32.mrf.mxu0
      %1762 = vmatprep.mubr.bf16.mxu0 0
      %1763 = vmatmul.mubr.bf16.gmra.mxu0 %v1480
      %v1764 = vpop.f32.mrf.mxu0
      %v1765 = vadd.f32 %v1512, %v1764
      %v1766 = vpop.f32.mrf.mxu0
      %v1767 = vpop.f32.mrf.mxu0
      %v1768 = vadd.f32 %v1512, %v1767
      %v1769 = vpop.f32.mrf.mxu0
      %1770 = vmatprep.mubr.bf16.mxu0 0
      %1771 = vmatmul.mubr.bf16.gmra.mxu0 %v1481
      %v1772 = vpop.f32.mrf.mxu0
      %v1773 = vadd.f32 %v1512, %v1772
      %v1774 = vpop.f32.mrf.mxu0
      %v1775 = vpop.f32.mrf.mxu0
      %v1776 = vadd.f32 %v1512, %v1775
      %v1777 = vpop.f32.mrf.mxu0
      %1778 = vmatprep.mubr.bf16.mxu0 0
      %1779 = vmatmul.mubr.bf16.gmra.mxu0 %v1482
      %v1780 = vpop.f32.mrf.mxu0
      %v1781 = vadd.f32 %v1512, %v1780
      %v1782 = vpop.f32.mrf.mxu0
      %v1783 = vpop.f32.mrf.mxu0
      %v1784 = vadd.f32 %v1512, %v1783
      %v1785 = vpop.f32.mrf.mxu0
      %1786 = vmatprep.mubr.bf16.mxu0 0
      %1787 = vmatmul.mubr.bf16.gmra.mxu0 %v1483
      %v1788 = vpop.f32.mrf.mxu0
      %v1789 = vadd.f32 %v1512, %v1788
      %v1790 = vpop.f32.mrf.mxu0
      %v1791 = vpop.f32.mrf.mxu0
      %v1792 = vadd.f32 %v1512, %v1791
      %v1793 = vpop.f32.mrf.mxu0
      %1794 = vmatprep.mubr.bf16.mxu0 0
      %1795 = vmatmul.mubr.bf16.gmra.mxu0 %v1484
      %v1796 = vpop.f32.mrf.mxu0
      %v1797 = vadd.f32 %v1512, %v1796
      %v1798 = vpop.f32.mrf.mxu0
      %v1799 = vpop.f32.mrf.mxu0
      %v1800 = vadd.f32 %v1512, %v1799
      %v1801 = vpop.f32.mrf.mxu0
      %1802 = vmatprep.mubr.bf16.mxu0 0
      %1803 = vmatmul.mubr.bf16.gmra.mxu0 %v1485
      %v1804 = vpop.f32.mrf.mxu0
      %v1805 = vadd.f32 %v1512, %v1804
      %v1806 = vpop.f32.mrf.mxu0
      %v1807 = vpop.f32.mrf.mxu0
      %v1808 = vadd.f32 %v1512, %v1807
      %v1809 = vpop.f32.mrf.mxu0
      %1810 = vmatprep.mubr.bf16.mxu0 0
      %1811 = vmatmul.mubr.bf16.gmra.mxu0 %v1486
      %v1812 = vpop.f32.mrf.mxu0
      %v1813 = vadd.f32 %v1512, %v1812
      %v1814 = vpop.f32.mrf.mxu0
      %v1815 = vpop.f32.mrf.mxu0
      %v1816 = vadd.f32 %v1512, %v1815
      %v1817 = vpop.f32.mrf.mxu0
      %1818 = vmatprep.mubr.bf16.mxu0 0
      %1819 = vmatmul.mubr.bf16.gmra.mxu0 %v1487
      %v1820 = vpop.f32.mrf.mxu0
      %v1821 = vadd.f32 %v1512, %v1820
      %v1822 = vpop.f32.mrf.mxu0
      %v1823 = vpop.f32.mrf.mxu0
      %v1824 = vadd.f32 %v1512, %v1823
      %v1825 = vpop.f32.mrf.mxu0
      %1826 = vmatprep.mubr.bf16.mxu0 0
      %1827 = vmatmul.mubr.bf16.gmra.mxu0 %v1488
      %v1828 = vpop.f32.mrf.mxu0
      %v1829 = vadd.f32 %v1512, %v1828
      %v1830 = vpop.f32.mrf.mxu0
      %v1831 = vpop.f32.mrf.mxu0
      %v1832 = vadd.f32 %v1512, %v1831
      %v1833 = vpop.f32.mrf.mxu0
      %1834 = vmatprep.mubr.bf16.mxu0 0
      %1835 = vmatmul.mubr.bf16.gmra.mxu0 %v1489
      %v1836 = vpop.f32.mrf.mxu0
      %v1837 = vadd.f32 %v1512, %v1836
      %v1838 = vpop.f32.mrf.mxu0
      %v1839 = vpop.f32.mrf.mxu0
      %v1840 = vadd.f32 %v1512, %v1839
      %v1841 = vpop.f32.mrf.mxu0
      %1842 = vmatprep.mubr.bf16.mxu0 0
      %1843 = vmatmul.mubr.bf16.gmra.mxu0 %v1490
      %v1844 = vpop.f32.mrf.mxu0
      %v1845 = vadd.f32 %v1512, %v1844
      %v1846 = vpop.f32.mrf.mxu0
      %v1847 = vpop.f32.mrf.mxu0
      %v1848 = vadd.f32 %v1512, %v1847
      %v1849 = vpop.f32.mrf.mxu0
      %1850 = vdwg.mxu0
      %v1851 = vmax.f32 %v1597, 0.0
      %v1852 = vmax.f32 %v1600, 0.0
      %v1853 = vmax.f32 %v1605, 0.0
      %v1854 = vmax.f32 %v1608, 0.0
      %v1855 = vmax.f32 %v1613, 0.0
      %v1856 = vmax.f32 %v1616, 0.0
      %v1857 = vmax.f32 %v1621, 0.0
      %v1858 = vmax.f32 %v1624, 0.0
      %v1859 = vmax.f32 %v1629, 0.0
      %v1860 = vmax.f32 %v1632, 0.0
      %v1861 = vmax.f32 %v1637, 0.0
      %v1862 = vmax.f32 %v1640, 0.0
      %v1863 = vmax.f32 %v1645, 0.0
      %v1864 = vmax.f32 %v1648, 0.0
      %v1865 = vmax.f32 %v1653, 0.0
      %v1866 = vmax.f32 %v1656, 0.0
      %v1867 = vmax.f32 %v1661, 0.0
      %v1868 = vmax.f32 %v1664, 0.0
      %v1869 = vmax.f32 %v1669, 0.0
      %v1870 = vmax.f32 %v1672, 0.0
      %v1871 = vmax.f32 %v1677, 0.0
      %v1872 = vmax.f32 %v1680, 0.0
      %v1873 = vmax.f32 %v1685, 0.0
      %v1874 = vmax.f32 %v1688, 0.0
      %v1875 = vmax.f32 %v1693, 0.0
      %v1876 = vmax.f32 %v1696, 0.0
      %v1877 = vmax.f32 %v1701, 0.0
      %v1878 = vmax.f32 %v1704, 0.0
      %v1879 = vmax.f32 %v1709, 0.0
      %v1880 = vmax.f32 %v1712, 0.0
      %v1881 = vmax.f32 %v1717, 0.0
      %v1882 = vmax.f32 %v1720, 0.0
      %v1883 = vmax.f32 %v1725, 0.0
      %v1884 = vmax.f32 %v1728, 0.0
      %v1885 = vmax.f32 %v1733, 0.0
      %v1886 = vmax.f32 %v1736, 0.0
      %v1887 = vmax.f32 %v1741, 0.0
      %v1888 = vmax.f32 %v1744, 0.0
      %v1889 = vmax.f32 %v1749, 0.0
      %v1890 = vmax.f32 %v1752, 0.0
      %v1891 = vmax.f32 %v1757, 0.0
      %v1892 = vmax.f32 %v1760, 0.0
      %v1893 = vmax.f32 %v1765, 0.0
      %v1894 = vmax.f32 %v1768, 0.0
      %v1895 = vmax.f32 %v1773, 0.0
      %v1896 = vmax.f32 %v1776, 0.0
      %v1897 = vmax.f32 %v1781, 0.0
      %v1898 = vmax.f32 %v1784, 0.0
      %v1899 = vmax.f32 %v1789, 0.0
      %v1900 = vmax.f32 %v1792, 0.0
      %v1901 = vmax.f32 %v1797, 0.0
      %v1902 = vmax.f32 %v1800, 0.0
      %v1903 = vmax.f32 %v1805, 0.0
      %v1904 = vmax.f32 %v1808, 0.0
      %v1905 = vmax.f32 %v1813, 0.0
      %v1906 = vmax.f32 %v1816, 0.0
      %v1907 = vmax.f32 %v1821, 0.0
      %v1908 = vmax.f32 %v1824, 0.0
      %v1909 = vmax.f32 %v1829, 0.0
      %v1910 = vmax.f32 %v1832, 0.0
      %v1911 = vmax.f32 %v1837, 0.0
      %v1912 = vmax.f32 %v1840, 0.0
      %v1913 = vmax.f32 %v1845, 0.0
      %v1914 = vmax.f32 %v1848, 0.0
      %v1915 = vpack.c.bf16 %v1852, %v1851
      %v1916 = vpack.c.bf16 %v1854, %v1853
      %v1917 = vpack.c.bf16 %v1856, %v1855
      %v1918 = vpack.c.bf16 %v1858, %v1857
      %v1919 = vpack.c.bf16 %v1860, %v1859
      %v1920 = vpack.c.bf16 %v1862, %v1861
      %v1921 = vpack.c.bf16 %v1864, %v1863
      %v1922 = vpack.c.bf16 %v1866, %v1865
      %v1923 = vpack.c.bf16 %v1868, %v1867
      %v1924 = vpack.c.bf16 %v1870, %v1869
      %v1925 = vpack.c.bf16 %v1872, %v1871
      %v1926 = vpack.c.bf16 %v1874, %v1873
      %v1927 = vpack.c.bf16 %v1876, %v1875
      %v1928 = vpack.c.bf16 %v1878, %v1877
      %v1929 = vpack.c.bf16 %v1880, %v1879
      %v1930 = vpack.c.bf16 %v1882, %v1881
      %v1931 = vpack.c.bf16 %v1884, %v1883
      %v1932 = vpack.c.bf16 %v1886, %v1885
      %v1933 = vpack.c.bf16 %v1888, %v1887
      %v1934 = vpack.c.bf16 %v1890, %v1889
      %v1935 = vpack.c.bf16 %v1892, %v1891
      %v1936 = vpack.c.bf16 %v1894, %v1893
      %v1937 = vpack.c.bf16 %v1896, %v1895
      %v1938 = vpack.c.bf16 %v1898, %v1897
      %v1939 = vpack.c.bf16 %v1900, %v1899
      %v1940 = vpack.c.bf16 %v1902, %v1901
      %v1941 = vpack.c.bf16 %v1904, %v1903
      %v1942 = vpack.c.bf16 %v1906, %v1905
      %v1943 = vpack.c.bf16 %v1908, %v1907
      %v1944 = vpack.c.bf16 %v1910, %v1909
      %v1945 = vpack.c.bf16 %v1912, %v1911
      %v1946 = vpack.c.bf16 %v1914, %v1913
      %v1947 = vld [vmem:[%s291] sm:$0xf]
      %v1948 = vld [vmem:[%s291 + $0x4] sm:$0xf]
      %v1949 = vld [vmem:[%s291 + $0x8] sm:$0xf]
      %v1950 = vld [vmem:[%s291 + $0xc] sm:$0xf]
      %v1951 = vld [vmem:[%s291 + $0x10] sm:$0xf]
      %v1952 = vld [vmem:[%s291 + $0x14] sm:$0xf]
      %v1953 = vld [vmem:[%s291 + $0x18] sm:$0xf]
      %v1954 = vld [vmem:[%s291 + $0x1c] sm:$0xf]
      %v1955 = vld [vmem:[%s291 + $0x20] sm:$0xf]
      %v1956 = vld [vmem:[%s291 + $0x24] sm:$0xf]
      %v1957 = vld [vmem:[%s291 + $0x28] sm:$0xf]
      %v1958 = vld [vmem:[%s291 + $0x2c] sm:$0xf]
      %v1959 = vld [vmem:[%s291 + $0x30] sm:$0xf]
      %v1960 = vld [vmem:[%s291 + $0x34] sm:$0xf]
      %v1961 = vld [vmem:[%s291 + $0x38] sm:$0xf]
      %v1962 = vld [vmem:[%s291 + $0x3c] sm:$0xf]
      %v1963 = vld [vmem:[%s294] sm:$0x1]
      %v1965 = vlaneseq
      %v1966 = vshrl.u32 %v1965, 7
      %v1967 = vsub.s32 0, %v1966
      %v1968 = vrot.slane %v1963, %v1967
      %v1986 = vunpack.c.l.b16 %v1947
      %v1987 = vunpack.c.l.b16 %v1948
      %v1988 = vunpack.c.l.b16 %v1949
      %v1989 = vunpack.c.l.b16 %v1950
      %v1990 = vunpack.c.l.b16 %v1951
      %v1991 = vunpack.c.l.b16 %v1952
      %v1992 = vunpack.c.l.b16 %v1953
      %v1993 = vunpack.c.l.b16 %v1954
      %v1994 = vunpack.c.l.b16 %v1955
      %v1995 = vunpack.c.l.b16 %v1956
      %v1996 = vunpack.c.l.b16 %v1957
      %v1997 = vunpack.c.l.b16 %v1958
      %v1998 = vunpack.c.l.b16 %v1959
      %v1999 = vunpack.c.l.b16 %v1960
      %v2000 = vunpack.c.l.b16 %v1961
      %v2001 = vunpack.c.l.b16 %v1962
      %v2002 = vpack.c.b16 %v1987, %v1986
      %v2003 = vpack.c.b16 %v1989, %v1988
      %v2004 = vpack.c.b16 %v1991, %v1990
      %v2005 = vpack.c.b16 %v1993, %v1992
      %v2006 = vpack.c.b16 %v1995, %v1994
      %v2007 = vpack.c.b16 %v1997, %v1996
      %v2008 = vpack.c.b16 %v1999, %v1998
      %v2009 = vpack.c.b16 %v2001, %v2000
      %2018 = vmatprep.subr.bf16.mxu0 0
      %2019 = vmatpush1.bf16.msra.mxu0 %v2009
      %2020 = vmatprep.subr.bf16.mxu0 0
      %2021 = vmatpush1.bf16.msra.mxu0 %v2008
      %2022 = vmatprep.subr.bf16.mxu0 0
      %2023 = vmatpush1.bf16.msra.mxu0 %v2007
      %2024 = vmatprep.subr.bf16.mxu0 0
      %2025 = vmatpush1.bf16.msra.mxu0 %v2006
      %2026 = vmatprep.subr.bf16.mxu0 0
      %2027 = vmatpush1.bf16.msra.mxu0 %v2005
      %2028 = vmatprep.subr.bf16.mxu0 0
      %2029 = vmatpush1.bf16.msra.mxu0 %v2004
      %2030 = vmatprep.subr.bf16.mxu0 0
      %2031 = vmatpush1.bf16.msra.mxu0 %v2003
      %2032 = vmatprep.subr.bf16.mxu0 0
      %2033 = vmatpush1.bf16.msra.mxu0 %v2002
      %2034 = vmatprep.subr.bf16.mxu0 0
      %2035 = vmatpush2.bf16.msra.mxu0 0
      %2036 = vmatprep.subr.bf16.mxu0 0
      %2037 = vmatpush2.bf16.msra.mxu0 0
      %2038 = vmatprep.subr.bf16.mxu0 0
      %2039 = vmatpush2.bf16.msra.mxu0 0
      %2040 = vmatprep.subr.bf16.mxu0 0
      %2041 = vmatpush2.bf16.msra.mxu0 0
      %2042 = vmatprep.subr.bf16.mxu0 0
      %2043 = vmatpush2.bf16.msra.mxu0 0
      %2044 = vmatprep.subr.bf16.mxu0 0
      %2045 = vmatpush2.bf16.msra.mxu0 0
      %2046 = vmatprep.subr.bf16.mxu0 0
      %2047 = vmatpush2.bf16.msra.mxu0 0
      %2048 = vmatprep.subr.bf16.mxu0 0
      %2049 = vmatpush2.bf16.msra.mxu0 0
      %2050 = vmatprep.mubr.bf16.mxu0 0
      %2051 = vmatmul.mubr.bf16.gmra.mxu0 %v1915
      %v2052 = vpop.f32.mrf.mxu0
      %v2053 = vadd.f32 %v1968, %v2052
      %v2054 = vpop.f32.mrf.mxu0
      %v2055 = vpop.f32.mrf.mxu0
      %v2056 = vadd.f32 %v1968, %v2055
      %v2057 = vpop.f32.mrf.mxu0
      %2058 = vmatprep.mubr.bf16.mxu0 0
      %2059 = vmatmul.mubr.bf16.gmra.mxu0 %v1916
      %v2060 = vpop.f32.mrf.mxu0
      %v2061 = vadd.f32 %v1968, %v2060
      %v2062 = vpop.f32.mrf.mxu0
      %v2063 = vpop.f32.mrf.mxu0
      %v2064 = vadd.f32 %v1968, %v2063
      %v2065 = vpop.f32.mrf.mxu0
      %2066 = vmatprep.mubr.bf16.mxu0 0
      %2067 = vmatmul.mubr.bf16.gmra.mxu0 %v1917
      %v2068 = vpop.f32.mrf.mxu0
      %v2069 = vadd.f32 %v1968, %v2068
      %v2070 = vpop.f32.mrf.mxu0
      %v2071 = vpop.f32.mrf.mxu0
      %v2072 = vadd.f32 %v1968, %v2071
      %v2073 = vpop.f32.mrf.mxu0
      %2074 = vmatprep.mubr.bf16.mxu0 0
      %2075 = vmatmul.mubr.bf16.gmra.mxu0 %v1918
      %v2076 = vpop.f32.mrf.mxu0
      %v2077 = vadd.f32 %v1968, %v2076
      %v2078 = vpop.f32.mrf.mxu0
      %v2079 = vpop.f32.mrf.mxu0
      %v2080 = vadd.f32 %v1968, %v2079
      %v2081 = vpop.f32.mrf.mxu0
      %2082 = vmatprep.mubr.bf16.mxu0 0
      %2083 = vmatmul.mubr.bf16.gmra.mxu0 %v1919
      %v2084 = vpop.f32.mrf.mxu0
      %v2085 = vadd.f32 %v1968, %v2084
      %v2086 = vpop.f32.mrf.mxu0
      %v2087 = vpop.f32.mrf.mxu0
      %v2088 = vadd.f32 %v1968, %v2087
      %v2089 = vpop.f32.mrf.mxu0
      %2090 = vmatprep.mubr.bf16.mxu0 0
      %2091 = vmatmul.mubr.bf16.gmra.mxu0 %v1920
      %v2092 = vpop.f32.mrf.mxu0
      %v2093 = vadd.f32 %v1968, %v2092
      %v2094 = vpop.f32.mrf.mxu0
      %v2095 = vpop.f32.mrf.mxu0
      %v2096 = vadd.f32 %v1968, %v2095
      %v2097 = vpop.f32.mrf.mxu0
      %2098 = vmatprep.mubr.bf16.mxu0 0
      %2099 = vmatmul.mubr.bf16.gmra.mxu0 %v1921
      %v2100 = vpop.f32.mrf.mxu0
      %v2101 = vadd.f32 %v1968, %v2100
      %v2102 = vpop.f32.mrf.mxu0
      %v2103 = vpop.f32.mrf.mxu0
      %v2104 = vadd.f32 %v1968, %v2103
      %v2105 = vpop.f32.mrf.mxu0
      %2106 = vmatprep.mubr.bf16.mxu0 0
      %2107 = vmatmul.mubr.bf16.gmra.mxu0 %v1922
      %v2108 = vpop.f32.mrf.mxu0
      %v2109 = vadd.f32 %v1968, %v2108
      %v2110 = vpop.f32.mrf.mxu0
      %v2111 = vpop.f32.mrf.mxu0
      %v2112 = vadd.f32 %v1968, %v2111
      %v2113 = vpop.f32.mrf.mxu0
      %2114 = vmatprep.mubr.bf16.mxu0 0
      %2115 = vmatmul.mubr.bf16.gmra.mxu0 %v1923
      %v2116 = vpop.f32.mrf.mxu0
      %v2117 = vadd.f32 %v1968, %v2116
      %v2118 = vpop.f32.mrf.mxu0
      %v2119 = vpop.f32.mrf.mxu0
      %v2120 = vadd.f32 %v1968, %v2119
      %v2121 = vpop.f32.mrf.mxu0
      %2122 = vmatprep.mubr.bf16.mxu0 0
      %2123 = vmatmul.mubr.bf16.gmra.mxu0 %v1924
      %v2124 = vpop.f32.mrf.mxu0
      %v2125 = vadd.f32 %v1968, %v2124
      %v2126 = vpop.f32.mrf.mxu0
      %v2127 = vpop.f32.mrf.mxu0
      %v2128 = vadd.f32 %v1968, %v2127
      %v2129 = vpop.f32.mrf.mxu0
      %2130 = vmatprep.mubr.bf16.mxu0 0
      %2131 = vmatmul.mubr.bf16.gmra.mxu0 %v1925
      %v2132 = vpop.f32.mrf.mxu0
      %v2133 = vadd.f32 %v1968, %v2132
      %v2134 = vpop.f32.mrf.mxu0
      %v2135 = vpop.f32.mrf.mxu0
      %v2136 = vadd.f32 %v1968, %v2135
      %v2137 = vpop.f32.mrf.mxu0
      %2138 = vmatprep.mubr.bf16.mxu0 0
      %2139 = vmatmul.mubr.bf16.gmra.mxu0 %v1926
      %v2140 = vpop.f32.mrf.mxu0
      %v2141 = vadd.f32 %v1968, %v2140
      %v2142 = vpop.f32.mrf.mxu0
      %v2143 = vpop.f32.mrf.mxu0
      %v2144 = vadd.f32 %v1968, %v2143
      %v2145 = vpop.f32.mrf.mxu0
      %2146 = vmatprep.mubr.bf16.mxu0 0
      %2147 = vmatmul.mubr.bf16.gmra.mxu0 %v1927
      %v2148 = vpop.f32.mrf.mxu0
      %v2149 = vadd.f32 %v1968, %v2148
      %v2150 = vpop.f32.mrf.mxu0
      %v2151 = vpop.f32.mrf.mxu0
      %v2152 = vadd.f32 %v1968, %v2151
      %v2153 = vpop.f32.mrf.mxu0
      %2154 = vmatprep.mubr.bf16.mxu0 0
      %2155 = vmatmul.mubr.bf16.gmra.mxu0 %v1928
      %v2156 = vpop.f32.mrf.mxu0
      %v2157 = vadd.f32 %v1968, %v2156
      %v2158 = vpop.f32.mrf.mxu0
      %v2159 = vpop.f32.mrf.mxu0
      %v2160 = vadd.f32 %v1968, %v2159
      %v2161 = vpop.f32.mrf.mxu0
      %2162 = vmatprep.mubr.bf16.mxu0 0
      %2163 = vmatmul.mubr.bf16.gmra.mxu0 %v1929
      %v2164 = vpop.f32.mrf.mxu0
      %v2165 = vadd.f32 %v1968, %v2164
      %v2166 = vpop.f32.mrf.mxu0
      %v2167 = vpop.f32.mrf.mxu0
      %v2168 = vadd.f32 %v1968, %v2167
      %v2169 = vpop.f32.mrf.mxu0
      %2170 = vmatprep.mubr.bf16.mxu0 0
      %2171 = vmatmul.mubr.bf16.gmra.mxu0 %v1930
      %v2172 = vpop.f32.mrf.mxu0
      %v2173 = vadd.f32 %v1968, %v2172
      %v2174 = vpop.f32.mrf.mxu0
      %v2175 = vpop.f32.mrf.mxu0
      %v2176 = vadd.f32 %v1968, %v2175
      %v2177 = vpop.f32.mrf.mxu0
      %2178 = vmatprep.mubr.bf16.mxu0 0
      %2179 = vmatmul.mubr.bf16.gmra.mxu0 %v1931
      %v2180 = vpop.f32.mrf.mxu0
      %v2181 = vadd.f32 %v1968, %v2180
      %v2182 = vpop.f32.mrf.mxu0
      %v2183 = vpop.f32.mrf.mxu0
      %v2184 = vadd.f32 %v1968, %v2183
      %v2185 = vpop.f32.mrf.mxu0
      %2186 = vmatprep.mubr.bf16.mxu0 0
      %2187 = vmatmul.mubr.bf16.gmra.mxu0 %v1932
      %v2188 = vpop.f32.mrf.mxu0
      %v2189 = vadd.f32 %v1968, %v2188
      %v2190 = vpop.f32.mrf.mxu0
      %v2191 = vpop.f32.mrf.mxu0
      %v2192 = vadd.f32 %v1968, %v2191
      %v2193 = vpop.f32.mrf.mxu0
      %2194 = vmatprep.mubr.bf16.mxu0 0
      %2195 = vmatmul.mubr.bf16.gmra.mxu0 %v1933
      %v2196 = vpop.f32.mrf.mxu0
      %v2197 = vadd.f32 %v1968, %v2196
      %v2198 = vpop.f32.mrf.mxu0
      %v2199 = vpop.f32.mrf.mxu0
      %v2200 = vadd.f32 %v1968, %v2199
      %v2201 = vpop.f32.mrf.mxu0
      %2202 = vmatprep.mubr.bf16.mxu0 0
      %2203 = vmatmul.mubr.bf16.gmra.mxu0 %v1934
      %v2204 = vpop.f32.mrf.mxu0
      %v2205 = vadd.f32 %v1968, %v2204
      %v2206 = vpop.f32.mrf.mxu0
      %v2207 = vpop.f32.mrf.mxu0
      %v2208 = vadd.f32 %v1968, %v2207
      %v2209 = vpop.f32.mrf.mxu0
      %2210 = vmatprep.mubr.bf16.mxu0 0
      %2211 = vmatmul.mubr.bf16.gmra.mxu0 %v1935
      %v2212 = vpop.f32.mrf.mxu0
      %v2213 = vadd.f32 %v1968, %v2212
      %v2214 = vpop.f32.mrf.mxu0
      %v2215 = vpop.f32.mrf.mxu0
      %v2216 = vadd.f32 %v1968, %v2215
      %v2217 = vpop.f32.mrf.mxu0
      %2218 = vmatprep.mubr.bf16.mxu0 0
      %2219 = vmatmul.mubr.bf16.gmra.mxu0 %v1936
      %v2220 = vpop.f32.mrf.mxu0
      %v2221 = vadd.f32 %v1968, %v2220
      %v2222 = vpop.f32.mrf.mxu0
      %v2223 = vpop.f32.mrf.mxu0
      %v2224 = vadd.f32 %v1968, %v2223
      %v2225 = vpop.f32.mrf.mxu0
      %2226 = vmatprep.mubr.bf16.mxu0 0
      %2227 = vmatmul.mubr.bf16.gmra.mxu0 %v1937
      %v2228 = vpop.f32.mrf.mxu0
      %v2229 = vadd.f32 %v1968, %v2228
      %v2230 = vpop.f32.mrf.mxu0
      %v2231 = vpop.f32.mrf.mxu0
      %v2232 = vadd.f32 %v1968, %v2231
      %v2233 = vpop.f32.mrf.mxu0
      %2234 = vmatprep.mubr.bf16.mxu0 0
      %2235 = vmatmul.mubr.bf16.gmra.mxu0 %v1938
      %v2236 = vpop.f32.mrf.mxu0
      %v2237 = vadd.f32 %v1968, %v2236
      %v2238 = vpop.f32.mrf.mxu0
      %v2239 = vpop.f32.mrf.mxu0
      %v2240 = vadd.f32 %v1968, %v2239
      %v2241 = vpop.f32.mrf.mxu0
      %2242 = vmatprep.mubr.bf16.mxu0 0
      %2243 = vmatmul.mubr.bf16.gmra.mxu0 %v1939
      %v2244 = vpop.f32.mrf.mxu0
      %v2245 = vadd.f32 %v1968, %v2244
      %v2246 = vpop.f32.mrf.mxu0
      %v2247 = vpop.f32.mrf.mxu0
      %v2248 = vadd.f32 %v1968, %v2247
      %v2249 = vpop.f32.mrf.mxu0
      %2250 = vmatprep.mubr.bf16.mxu0 0
      %2251 = vmatmul.mubr.bf16.gmra.mxu0 %v1940
      %v2252 = vpop.f32.mrf.mxu0
      %v2253 = vadd.f32 %v1968, %v2252
      %v2254 = vpop.f32.mrf.mxu0
      %v2255 = vpop.f32.mrf.mxu0
      %v2256 = vadd.f32 %v1968, %v2255
      %v2257 = vpop.f32.mrf.mxu0
      %2258 = vmatprep.mubr.bf16.mxu0 0
      %2259 = vmatmul.mubr.bf16.gmra.mxu0 %v1941
      %v2260 = vpop.f32.mrf.mxu0
      %v2261 = vadd.f32 %v1968, %v2260
      %v2262 = vpop.f32.mrf.mxu0
      %v2263 = vpop.f32.mrf.mxu0
      %v2264 = vadd.f32 %v1968, %v2263
      %v2265 = vpop.f32.mrf.mxu0
      %2266 = vmatprep.mubr.bf16.mxu0 0
      %2267 = vmatmul.mubr.bf16.gmra.mxu0 %v1942
      %v2268 = vpop.f32.mrf.mxu0
      %v2269 = vadd.f32 %v1968, %v2268
      %v2270 = vpop.f32.mrf.mxu0
      %v2271 = vpop.f32.mrf.mxu0
      %v2272 = vadd.f32 %v1968, %v2271
      %v2273 = vpop.f32.mrf.mxu0
      %2274 = vmatprep.mubr.bf16.mxu0 0
      %2275 = vmatmul.mubr.bf16.gmra.mxu0 %v1943
      %v2276 = vpop.f32.mrf.mxu0
      %v2277 = vadd.f32 %v1968, %v2276
      %v2278 = vpop.f32.mrf.mxu0
      %v2279 = vpop.f32.mrf.mxu0
      %v2280 = vadd.f32 %v1968, %v2279
      %v2281 = vpop.f32.mrf.mxu0
      %2282 = vmatprep.mubr.bf16.mxu0 0
      %2283 = vmatmul.mubr.bf16.gmra.mxu0 %v1944
      %v2284 = vpop.f32.mrf.mxu0
      %v2285 = vadd.f32 %v1968, %v2284
      %v2286 = vpop.f32.mrf.mxu0
      %v2287 = vpop.f32.mrf.mxu0
      %v2288 = vadd.f32 %v1968, %v2287
      %v2289 = vpop.f32.mrf.mxu0
      %2290 = vmatprep.mubr.bf16.mxu0 0
      %2291 = vmatmul.mubr.bf16.gmra.mxu0 %v1945
      %v2292 = vpop.f32.mrf.mxu0
      %v2293 = vadd.f32 %v1968, %v2292
      %v2294 = vpop.f32.mrf.mxu0
      %v2295 = vpop.f32.mrf.mxu0
      %v2296 = vadd.f32 %v1968, %v2295
      %v2297 = vpop.f32.mrf.mxu0
      %2298 = vmatprep.mubr.bf16.mxu0 0
      %2299 = vmatmul.mubr.bf16.gmra.mxu0 %v1946
      %v2300 = vpop.f32.mrf.mxu0
      %v2301 = vadd.f32 %v1968, %v2300
      %v2302 = vpop.f32.mrf.mxu0
      %v2303 = vpop.f32.mrf.mxu0
      %v2304 = vadd.f32 %v1968, %v2303
      %v2305 = vpop.f32.mrf.mxu0
      %2306 = vdwg.mxu0
      %v2307 = vmax.f32 %v2053, 0.0
      %v2308 = vmax.f32 %v2056, 0.0
      %v2309 = vmax.f32 %v2061, 0.0
      %v2310 = vmax.f32 %v2064, 0.0
      %v2311 = vmax.f32 %v2069, 0.0
      %v2312 = vmax.f32 %v2072, 0.0
      %v2313 = vmax.f32 %v2077, 0.0
      %v2314 = vmax.f32 %v2080, 0.0
      %v2315 = vmax.f32 %v2085, 0.0
      %v2316 = vmax.f32 %v2088, 0.0
      %v2317 = vmax.f32 %v2093, 0.0
      %v2318 = vmax.f32 %v2096, 0.0
      %v2319 = vmax.f32 %v2101, 0.0
      %v2320 = vmax.f32 %v2104, 0.0
      %v2321 = vmax.f32 %v2109, 0.0
      %v2322 = vmax.f32 %v2112, 0.0
      %v2323 = vmax.f32 %v2117, 0.0
      %v2324 = vmax.f32 %v2120, 0.0
      %v2325 = vmax.f32 %v2125, 0.0
      %v2326 = vmax.f32 %v2128, 0.0
      %v2327 = vmax.f32 %v2133, 0.0
      %v2328 = vmax.f32 %v2136, 0.0
      %v2329 = vmax.f32 %v2141, 0.0
      %v2330 = vmax.f32 %v2144, 0.0
      %v2331 = vmax.f32 %v2149, 0.0
      %v2332 = vmax.f32 %v2152, 0.0
      %v2333 = vmax.f32 %v2157, 0.0
      %v2334 = vmax.f32 %v2160, 0.0
      %v2335 = vmax.f32 %v2165, 0.0
      %v2336 = vmax.f32 %v2168, 0.0
      %v2337 = vmax.f32 %v2173, 0.0
      %v2338 = vmax.f32 %v2176, 0.0
      %v2339 = vmax.f32 %v2181, 0.0
      %v2340 = vmax.f32 %v2184, 0.0
      %v2341 = vmax.f32 %v2189, 0.0
      %v2342 = vmax.f32 %v2192, 0.0
      %v2343 = vmax.f32 %v2197, 0.0
      %v2344 = vmax.f32 %v2200, 0.0
      %v2345 = vmax.f32 %v2205, 0.0
      %v2346 = vmax.f32 %v2208, 0.0
      %v2347 = vmax.f32 %v2213, 0.0
      %v2348 = vmax.f32 %v2216, 0.0
      %v2349 = vmax.f32 %v2221, 0.0
      %v2350 = vmax.f32 %v2224, 0.0
      %v2351 = vmax.f32 %v2229, 0.0
      %v2352 = vmax.f32 %v2232, 0.0
      %v2353 = vmax.f32 %v2237, 0.0
      %v2354 = vmax.f32 %v2240, 0.0
      %v2355 = vmax.f32 %v2245, 0.0
      %v2356 = vmax.f32 %v2248, 0.0
      %v2357 = vmax.f32 %v2253, 0.0
      %v2358 = vmax.f32 %v2256, 0.0
      %v2359 = vmax.f32 %v2261, 0.0
      %v2360 = vmax.f32 %v2264, 0.0
      %v2361 = vmax.f32 %v2269, 0.0
      %v2362 = vmax.f32 %v2272, 0.0
      %v2363 = vmax.f32 %v2277, 0.0
      %v2364 = vmax.f32 %v2280, 0.0
      %v2365 = vmax.f32 %v2285, 0.0
      %v2366 = vmax.f32 %v2288, 0.0
      %v2367 = vmax.f32 %v2293, 0.0
      %v2368 = vmax.f32 %v2296, 0.0
      %v2369 = vmax.f32 %v2301, 0.0
      %v2370 = vmax.f32 %v2304, 0.0
      %v2371 = vpack.c.bf16 %v2308, %v2307
      %v2372 = vpack.c.bf16 %v2310, %v2309
      %v2373 = vpack.c.bf16 %v2312, %v2311
      %v2374 = vpack.c.bf16 %v2314, %v2313
      %v2375 = vpack.c.bf16 %v2316, %v2315
      %v2376 = vpack.c.bf16 %v2318, %v2317
      %v2377 = vpack.c.bf16 %v2320, %v2319
      %v2378 = vpack.c.bf16 %v2322, %v2321
      %v2379 = vpack.c.bf16 %v2324, %v2323
      %v2380 = vpack.c.bf16 %v2326, %v2325
      %v2381 = vpack.c.bf16 %v2328, %v2327
      %v2382 = vpack.c.bf16 %v2330, %v2329
      %v2383 = vpack.c.bf16 %v2332, %v2331
      %v2384 = vpack.c.bf16 %v2334, %v2333
      %v2385 = vpack.c.bf16 %v2336, %v2335
      %v2386 = vpack.c.bf16 %v2338, %v2337
      %v2387 = vpack.c.bf16 %v2340, %v2339
      %v2388 = vpack.c.bf16 %v2342, %v2341
      %v2389 = vpack.c.bf16 %v2344, %v2343
      %v2390 = vpack.c.bf16 %v2346, %v2345
      %v2391 = vpack.c.bf16 %v2348, %v2347
      %v2392 = vpack.c.bf16 %v2350, %v2349
      %v2393 = vpack.c.bf16 %v2352, %v2351
      %v2394 = vpack.c.bf16 %v2354, %v2353
      %v2395 = vpack.c.bf16 %v2356, %v2355
      %v2396 = vpack.c.bf16 %v2358, %v2357
      %v2397 = vpack.c.bf16 %v2360, %v2359
      %v2398 = vpack.c.bf16 %v2362, %v2361
      %v2399 = vpack.c.bf16 %v2364, %v2363
      %v2400 = vpack.c.bf16 %v2366, %v2365
      %v2401 = vpack.c.bf16 %v2368, %v2367
      %v2402 = vpack.c.bf16 %v2370, %v2369
      %v2435 = vunpack.c.l.b16 %v2371
      %v2436 = vunpack.c.h.b16 %v2371
      %v2437 = vunpack.c.l.b16 %v2372
      %v2438 = vunpack.c.h.b16 %v2372
      %v2439 = vunpack.c.l.b16 %v2373
      %v2440 = vunpack.c.h.b16 %v2373
      %v2441 = vunpack.c.l.b16 %v2374
      %v2442 = vunpack.c.h.b16 %v2374
      %v2443 = vunpack.c.l.b16 %v2375
      %v2444 = vunpack.c.h.b16 %v2375
      %v2445 = vunpack.c.l.b16 %v2376
      %v2446 = vunpack.c.h.b16 %v2376
      %v2447 = vunpack.c.l.b16 %v2377
      %v2448 = vunpack.c.h.b16 %v2377
      %v2449 = vunpack.c.l.b16 %v2378
      %v2450 = vunpack.c.h.b16 %v2378
      %v2451 = vunpack.c.l.b16 %v2379
      %v2452 = vunpack.c.h.b16 %v2379
      %v2453 = vunpack.c.l.b16 %v2380
      %v2454 = vunpack.c.h.b16 %v2380
      %v2455 = vunpack.c.l.b16 %v2381
      %v2456 = vunpack.c.h.b16 %v2381
      %v2457 = vunpack.c.l.b16 %v2382
      %v2458 = vunpack.c.h.b16 %v2382
      %v2459 = vunpack.c.l.b16 %v2383
      %v2460 = vunpack.c.h.b16 %v2383
      %v2461 = vunpack.c.l.b16 %v2384
      %v2462 = vunpack.c.h.b16 %v2384
      %v2463 = vunpack.c.l.b16 %v2385
      %v2464 = vunpack.c.h.b16 %v2385
      %v2465 = vunpack.c.l.b16 %v2386
      %v2466 = vunpack.c.h.b16 %v2386
      %v2467 = vunpack.c.l.b16 %v2387
      %v2468 = vunpack.c.h.b16 %v2387
      %v2469 = vunpack.c.l.b16 %v2388
      %v2470 = vunpack.c.h.b16 %v2388
      %v2471 = vunpack.c.l.b16 %v2389
      %v2472 = vunpack.c.h.b16 %v2389
      %v2473 = vunpack.c.l.b16 %v2390
      %v2474 = vunpack.c.h.b16 %v2390
      %v2475 = vunpack.c.l.b16 %v2391
      %v2476 = vunpack.c.h.b16 %v2391
      %v2477 = vunpack.c.l.b16 %v2392
      %v2478 = vunpack.c.h.b16 %v2392
      %v2479 = vunpack.c.l.b16 %v2393
      %v2480 = vunpack.c.h.b16 %v2393
      %v2481 = vunpack.c.l.b16 %v2394
      %v2482 = vunpack.c.h.b16 %v2394
      %v2483 = vunpack.c.l.b16 %v2395
      %v2484 = vunpack.c.h.b16 %v2395
      %v2485 = vunpack.c.l.b16 %v2396
      %v2486 = vunpack.c.h.b16 %v2396
      %v2487 = vunpack.c.l.b16 %v2397
      %v2488 = vunpack.c.h.b16 %v2397
      %v2489 = vunpack.c.l.b16 %v2398
      %v2490 = vunpack.c.h.b16 %v2398
      %v2491 = vunpack.c.l.b16 %v2399
      %v2492 = vunpack.c.h.b16 %v2399
      %v2493 = vunpack.c.l.b16 %v2400
      %v2494 = vunpack.c.h.b16 %v2400
      %v2495 = vunpack.c.l.b16 %v2401
      %v2496 = vunpack.c.h.b16 %v2401
      %v2497 = vunpack.c.l.b16 %v2402
      %v2498 = vunpack.c.h.b16 %v2402
      %v2499 = vpack.c.b16 %v2435, %v2435
      %v2500 = vpack.c.b16 %v2436, %v2436
      %v2501 = vpack.c.b16 %v2437, %v2437
      %v2502 = vpack.c.b16 %v2438, %v2438
      %v2503 = vpack.c.b16 %v2439, %v2439
      %v2504 = vpack.c.b16 %v2440, %v2440
      %v2505 = vpack.c.b16 %v2441, %v2441
      %v2506 = vpack.c.b16 %v2442, %v2442
      %v2507 = vpack.c.b16 %v2443, %v2443
      %v2508 = vpack.c.b16 %v2444, %v2444
      %v2509 = vpack.c.b16 %v2445, %v2445
      %v2510 = vpack.c.b16 %v2446, %v2446
      %v2511 = vpack.c.b16 %v2447, %v2447
      %v2512 = vpack.c.b16 %v2448, %v2448
      %v2513 = vpack.c.b16 %v2449, %v2449
      %v2514 = vpack.c.b16 %v2450, %v2450
      %v2515 = vpack.c.b16 %v2451, %v2451
      %v2516 = vpack.c.b16 %v2452, %v2452
      %v2517 = vpack.c.b16 %v2453, %v2453
      %v2518 = vpack.c.b16 %v2454, %v2454
      %v2519 = vpack.c.b16 %v2455, %v2455
      %v2520 = vpack.c.b16 %v2456, %v2456
      %v2521 = vpack.c.b16 %v2457, %v2457
      %v2522 = vpack.c.b16 %v2458, %v2458
      %v2523 = vpack.c.b16 %v2459, %v2459
      %v2524 = vpack.c.b16 %v2460, %v2460
      %v2525 = vpack.c.b16 %v2461, %v2461
      %v2526 = vpack.c.b16 %v2462, %v2462
      %v2527 = vpack.c.b16 %v2463, %v2463
      %v2528 = vpack.c.b16 %v2464, %v2464
      %v2529 = vpack.c.b16 %v2465, %v2465
      %v2530 = vpack.c.b16 %v2466, %v2466
      %v2531 = vpack.c.b16 %v2467, %v2467
      %v2532 = vpack.c.b16 %v2468, %v2468
      %v2533 = vpack.c.b16 %v2469, %v2469
      %v2534 = vpack.c.b16 %v2470, %v2470
      %v2535 = vpack.c.b16 %v2471, %v2471
      %v2536 = vpack.c.b16 %v2472, %v2472
      %v2537 = vpack.c.b16 %v2473, %v2473
      %v2538 = vpack.c.b16 %v2474, %v2474
      %v2539 = vpack.c.b16 %v2475, %v2475
      %v2540 = vpack.c.b16 %v2476, %v2476
      %v2541 = vpack.c.b16 %v2477, %v2477
      %v2542 = vpack.c.b16 %v2478, %v2478
      %v2543 = vpack.c.b16 %v2479, %v2479
      %v2544 = vpack.c.b16 %v2480, %v2480
      %v2545 = vpack.c.b16 %v2481, %v2481
      %v2546 = vpack.c.b16 %v2482, %v2482
      %v2547 = vpack.c.b16 %v2483, %v2483
      %v2548 = vpack.c.b16 %v2484, %v2484
      %v2549 = vpack.c.b16 %v2485, %v2485
      %v2550 = vpack.c.b16 %v2486, %v2486
      %v2551 = vpack.c.b16 %v2487, %v2487
      %v2552 = vpack.c.b16 %v2488, %v2488
      %v2553 = vpack.c.b16 %v2489, %v2489
      %v2554 = vpack.c.b16 %v2490, %v2490
      %v2555 = vpack.c.b16 %v2491, %v2491
      %v2556 = vpack.c.b16 %v2492, %v2492
      %v2557 = vpack.c.b16 %v2493, %v2493
      %v2558 = vpack.c.b16 %v2494, %v2494
      %v2559 = vpack.c.b16 %v2495, %v2495
      %v2560 = vpack.c.b16 %v2496, %v2496
      %v2561 = vpack.c.b16 %v2497, %v2497
      %v2562 = vpack.c.b16 %v2498, %v2498
      %2627 = vst [vmem:[#allocation2] sm:$0xf] %v2499
      %2628 = vst [vmem:[#allocation2 + $0x4] sm:$0xf] %v2500
      %2629 = vst [vmem:[#allocation2 + $0x8] sm:$0xf] %v2501
      %2630 = vst [vmem:[#allocation2 + $0xc] sm:$0xf] %v2502
      %2631 = vst [vmem:[#allocation2 + $0x10] sm:$0xf] %v2503
      %2632 = vst [vmem:[#allocation2 + $0x14] sm:$0xf] %v2504
      %2633 = vst [vmem:[#allocation2 + $0x18] sm:$0xf] %v2505
      %2634 = vst [vmem:[#allocation2 + $0x1c] sm:$0xf] %v2506
      %2635 = vst [vmem:[#allocation2 + $0x20] sm:$0xf] %v2507
      %2636 = vst [vmem:[#allocation2 + $0x24] sm:$0xf] %v2508
      %2637 = vst [vmem:[#allocation2 + $0x28] sm:$0xf] %v2509
      %2638 = vst [vmem:[#allocation2 + $0x2c] sm:$0xf] %v2510
      %2639 = vst [vmem:[#allocation2 + $0x30] sm:$0xf] %v2511
      %2640 = vst [vmem:[#allocation2 + $0x34] sm:$0xf] %v2512
      %2641 = vst [vmem:[#allocation2 + $0x38] sm:$0xf] %v2513
      %2642 = vst [vmem:[#allocation2 + $0x3c] sm:$0xf] %v2514
      %2643 = vst [vmem:[#allocation2 + $0x40] sm:$0xf] %v2515
      %2644 = vst [vmem:[#allocation2 + $0x44] sm:$0xf] %v2516
      %2645 = vst [vmem:[#allocation2 + $0x48] sm:$0xf] %v2517
      %2646 = vst [vmem:[#allocation2 + $0x4c] sm:$0xf] %v2518
      %2647 = vst [vmem:[#allocation2 + $0x50] sm:$0xf] %v2519
      %2648 = vst [vmem:[#allocation2 + $0x54] sm:$0xf] %v2520
      %2649 = vst [vmem:[#allocation2 + $0x58] sm:$0xf] %v2521
      %2650 = vst [vmem:[#allocation2 + $0x5c] sm:$0xf] %v2522
      %2651 = vst [vmem:[#allocation2 + $0x60] sm:$0xf] %v2523
      %2652 = vst [vmem:[#allocation2 + $0x64] sm:$0xf] %v2524
      %2653 = vst [vmem:[#allocation2 + $0x68] sm:$0xf] %v2525
      %2654 = vst [vmem:[#allocation2 + $0x6c] sm:$0xf] %v2526
      %2655 = vst [vmem:[#allocation2 + $0x70] sm:$0xf] %v2527
      %2656 = vst [vmem:[#allocation2 + $0x74] sm:$0xf] %v2528
      %2657 = vst [vmem:[#allocation2 + $0x78] sm:$0xf] %v2529
      %2658 = vst [vmem:[#allocation2 + $0x7c] sm:$0xf] %v2530
      %2659 = vst [vmem:[#allocation2 + $0x80] sm:$0xf] %v2531
      %2660 = vst [vmem:[#allocation2 + $0x84] sm:$0xf] %v2532
      %2661 = vst [vmem:[#allocation2 + $0x88] sm:$0xf] %v2533
      %2662 = vst [vmem:[#allocation2 + $0x8c] sm:$0xf] %v2534
      %2663 = vst [vmem:[#allocation2 + $0x90] sm:$0xf] %v2535
      %2664 = vst [vmem:[#allocation2 + $0x94] sm:$0xf] %v2536
      %2665 = vst [vmem:[#allocation2 + $0x98] sm:$0xf] %v2537
      %2666 = vst [vmem:[#allocation2 + $0x9c] sm:$0xf] %v2538
      %2667 = vst [vmem:[#allocation2 + $0xa0] sm:$0xf] %v2539
      %2668 = vst [vmem:[#allocation2 + $0xa4] sm:$0xf] %v2540
      %2669 = vst [vmem:[#allocation2 + $0xa8] sm:$0xf] %v2541
      %2670 = vst [vmem:[#allocation2 + $0xac] sm:$0xf] %v2542
      %2671 = vst [vmem:[#allocation2 + $0xb0] sm:$0xf] %v2543
      %2672 = vst [vmem:[#allocation2 + $0xb4] sm:$0xf] %v2544
      %2673 = vst [vmem:[#allocation2 + $0xb8] sm:$0xf] %v2545
      %2674 = vst [vmem:[#allocation2 + $0xbc] sm:$0xf] %v2546
      %2675 = vst [vmem:[#allocation2 + $0xc0] sm:$0xf] %v2547
      %2676 = vst [vmem:[#allocation2 + $0xc4] sm:$0xf] %v2548
      %2677 = vst [vmem:[#allocation2 + $0xc8] sm:$0xf] %v2549
      %2678 = vst [vmem:[#allocation2 + $0xcc] sm:$0xf] %v2550
      %2679 = vst [vmem:[#allocation2 + $0xd0] sm:$0xf] %v2551
      %2680 = vst [vmem:[#allocation2 + $0xd4] sm:$0xf] %v2552
      %2681 = vst [vmem:[#allocation2 + $0xd8] sm:$0xf] %v2553
      %2682 = vst [vmem:[#allocation2 + $0xdc] sm:$0xf] %v2554
      %2683 = vst [vmem:[#allocation2 + $0xe0] sm:$0xf] %v2555
      %2684 = vst [vmem:[#allocation2 + $0xe4] sm:$0xf] %v2556
      %2685 = vst [vmem:[#allocation2 + $0xe8] sm:$0xf] %v2557
      %2686 = vst [vmem:[#allocation2 + $0xec] sm:$0xf] %v2558
      %2687 = vst [vmem:[#allocation2 + $0xf0] sm:$0xf] %v2559
      %2688 = vst [vmem:[#allocation2 + $0xf4] sm:$0xf] %v2560
      %2689 = vst [vmem:[#allocation2 + $0xf8] sm:$0xf] %v2561
      %2690 = vst [vmem:[#allocation2 + $0xfc] sm:$0xf] %v2562
      %2691 = vst [vmem:[%s299] sm:$0xf] %v2499
      %2692 = vst [vmem:[%s299 + $0x4] sm:$0xf] %v2500
      %2693 = vst [vmem:[%s299 + $0x8] sm:$0xf] %v2501
      %2694 = vst [vmem:[%s299 + $0xc] sm:$0xf] %v2502
      %2695 = vst [vmem:[%s299 + $0x10] sm:$0xf] %v2503
      %2696 = vst [vmem:[%s299 + $0x14] sm:$0xf] %v2504
      %2697 = vst [vmem:[%s299 + $0x18] sm:$0xf] %v2505
      %2698 = vst [vmem:[%s299 + $0x1c] sm:$0xf] %v2506
      %2699 = vst [vmem:[%s299 + $0x20] sm:$0xf] %v2507
      %2700 = vst [vmem:[%s299 + $0x24] sm:$0xf] %v2508
      %2701 = vst [vmem:[%s299 + $0x28] sm:$0xf] %v2509
      %2702 = vst [vmem:[%s299 + $0x2c] sm:$0xf] %v2510
      %2703 = vst [vmem:[%s299 + $0x30] sm:$0xf] %v2511
      %2704 = vst [vmem:[%s299 + $0x34] sm:$0xf] %v2512
      %2705 = vst [vmem:[%s299 + $0x38] sm:$0xf] %v2513
      %2706 = vst [vmem:[%s299 + $0x3c] sm:$0xf] %v2514
      %2707 = vst [vmem:[%s299 + $0x40] sm:$0xf] %v2515
      %2708 = vst [vmem:[%s299 + $0x44] sm:$0xf] %v2516
      %2709 = vst [vmem:[%s299 + $0x48] sm:$0xf] %v2517
      %2710 = vst [vmem:[%s299 + $0x4c] sm:$0xf] %v2518
      %2711 = vst [vmem:[%s299 + $0x50] sm:$0xf] %v2519
      %2712 = vst [vmem:[%s299 + $0x54] sm:$0xf] %v2520
      %2713 = vst [vmem:[%s299 + $0x58] sm:$0xf] %v2521
      %2714 = vst [vmem:[%s299 + $0x5c] sm:$0xf] %v2522
      %2715 = vst [vmem:[%s299 + $0x60] sm:$0xf] %v2523
      %2716 = vst [vmem:[%s299 + $0x64] sm:$0xf] %v2524
      %2717 = vst [vmem:[%s299 + $0x68] sm:$0xf] %v2525
      %2718 = vst [vmem:[%s299 + $0x6c] sm:$0xf] %v2526
      %2719 = vst [vmem:[%s299 + $0x70] sm:$0xf] %v2527
      %2720 = vst [vmem:[%s299 + $0x74] sm:$0xf] %v2528
      %2721 = vst [vmem:[%s299 + $0x78] sm:$0xf] %v2529
      %2722 = vst [vmem:[%s299 + $0x7c] sm:$0xf] %v2530
      %2723 = vst [vmem:[%s299 + $0x80] sm:$0xf] %v2531
      %2724 = vst [vmem:[%s299 + $0x84] sm:$0xf] %v2532
      %2725 = vst [vmem:[%s299 + $0x88] sm:$0xf] %v2533
      %2726 = vst [vmem:[%s299 + $0x8c] sm:$0xf] %v2534
      %2727 = vst [vmem:[%s299 + $0x90] sm:$0xf] %v2535
      %2728 = vst [vmem:[%s299 + $0x94] sm:$0xf] %v2536
      %2729 = vst [vmem:[%s299 + $0x98] sm:$0xf] %v2537
      %2730 = vst [vmem:[%s299 + $0x9c] sm:$0xf] %v2538
      %2731 = vst [vmem:[%s299 + $0xa0] sm:$0xf] %v2539
      %2732 = vst [vmem:[%s299 + $0xa4] sm:$0xf] %v2540
      %2733 = vst [vmem:[%s299 + $0xa8] sm:$0xf] %v2541
      %2734 = vst [vmem:[%s299 + $0xac] sm:$0xf] %v2542
      %2735 = vst [vmem:[%s299 + $0xb0] sm:$0xf] %v2543
      %2736 = vst [vmem:[%s299 + $0xb4] sm:$0xf] %v2544
      %2737 = vst [vmem:[%s299 + $0xb8] sm:$0xf] %v2545
      %2738 = vst [vmem:[%s299 + $0xbc] sm:$0xf] %v2546
      %2739 = vst [vmem:[%s299 + $0xc0] sm:$0xf] %v2547
      %2740 = vst [vmem:[%s299 + $0xc4] sm:$0xf] %v2548
      %2741 = vst [vmem:[%s299 + $0xc8] sm:$0xf] %v2549
      %2742 = vst [vmem:[%s299 + $0xcc] sm:$0xf] %v2550
      %2743 = vst [vmem:[%s299 + $0xd0] sm:$0xf] %v2551
      %2744 = vst [vmem:[%s299 + $0xd4] sm:$0xf] %v2552
      %2745 = vst [vmem:[%s299 + $0xd8] sm:$0xf] %v2553
      %2746 = vst [vmem:[%s299 + $0xdc] sm:$0xf] %v2554
      %2747 = vst [vmem:[%s299 + $0xe0] sm:$0xf] %v2555
      %2748 = vst [vmem:[%s299 + $0xe4] sm:$0xf] %v2556
      %2749 = vst [vmem:[%s299 + $0xe8] sm:$0xf] %v2557
      %2750 = vst [vmem:[%s299 + $0xec] sm:$0xf] %v2558
      %2751 = vst [vmem:[%s299 + $0xf0] sm:$0xf] %v2559
      %2752 = vst [vmem:[%s299 + $0xf4] sm:$0xf] %v2560
      %2753 = vst [vmem:[%s299 + $0xf8] sm:$0xf] %v2561
      %2754 = vst [vmem:[%s299 + $0xfc] sm:$0xf] %v2562
      %p2755 = scmp.lt.s32.totalorder %s17, 2
      %s2756 = scalar_select %p2755, %s17, 2
      %s2757 = smul.addr %s2756, 64
      %s2758 = smul.addr %s2757, 4
      %s2759 = scalar_lea.vmem %s6, %s2758
      // Predicated region
      $region49: #{gin_encoder_forward.1} parent=43 // pred_check
        %p2760 = pneg %p181
      $region50: #{gin_encoder_forward.1} parent=43 // pred_check_branch
        %2762 = sbr.rel (%p2760) target = $region52
      $region51: #{gin_encoder_forward.1} parent=43 // pred_region
        _
      $region52: #{gin_encoder_forward.1} parent=43 // pred_fallthru
        _
    $region44: #{gin_encoder_forward.1} parent=5 // pred_fallthru
      _
    %p2763 = scmp.le.s32.totalorder 2, %s12
    // Predicated region
    $region53: #{gin_encoder_forward.1} parent=5 // pred_check
      %p2764 = pneg %p2763
    $region54: #{gin_encoder_forward.1} parent=5 // pred_check_branch
      %2766 = sbr.rel (%p2764) target = $region56
    $region55: #{gin_encoder_forward.1} parent=5 // pred_region
      %s2767 = ssub.s32 %s12, 2
      // Predicated region
      $region57: #{gin_encoder_forward.1} parent=55 // pred_check
        %p2768 = pneg %p187
      $region58: #{gin_encoder_forward.1} parent=55 // pred_check_branch
        %2770 = sbr.rel (%p2768) target = $region60
      $region59: #{gin_encoder_forward.1} parent=55 // pred_region
        %p2771 = scmp.lt.s32.totalorder %s18, 2
        %s2772 = scalar_select %p2771, %s18, 2
        %s2773 = smul.addr %s2772, 64
        %s2774 = smul.addr %s2773, 4
        %s2775 = scalar_lea.vmem %s6, %s2774
      $region60: #{gin_encoder_forward.1} parent=55 // pred_fallthru
        _
    $region56: #{gin_encoder_forward.1} parent=5 // pred_fallthru
      _
  $region6: #{gin_encoder_forward.1} parent=0 // loop_footer
    %s16 = sadd.s32 1, %s12
  $region7: #{gin_encoder_forward.1} parent=0 // loop_footer_branch
    %11 = sbr.rel target = $region3
  $region8: #{gin_encoder_forward.1} parent=0 // loop_exit
    _

</llo_original>
